<compile_context>
chip_gen: v7x
topology: tpu7x:2x2x1
jax: 0.10.0
libtpu: 0.0.40
codegen_flags: <defaults>
</compile_context>

<pallas_src>
import jax
import jax.numpy as jnp
from jax.experimental import pallas as pl
from jax.experimental.pallas import tpu as pltpu

# ----------------------- problem sizes (consistent with the module) ---------
BATCH = 2
LASER_DIM_IN = 720                      # hard-coded in the module
FEATURE_DIM_IN = 4                      # state_dim - laser_dim
STATE_DIM_IN = LASER_DIM_IN + FEATURE_DIM_IN   # 724
ACTION_DIM = 2
HIDDEN = 64                             # head.feature_dim

DETERMINISTIC = False
LASER_DIM_OUT = LASER_DIM_IN * (1 if DETERMINISTIC else 2)      # 1440
FEATURE_DIM_OUT = FEATURE_DIM_IN * (1 if DETERMINISTIC else 2)  # 8

# Interleaved (non-deterministic) output layout produced directly by the kernel:
#   [ ls[:, :HL] | fs[:, :HF] | ls[:, HL:] | fs[:, HF:] | r | d | zero-pad ]
HL = LASER_DIM_OUT if DETERMINISTIC else LASER_DIM_OUT // 2      # 720
HF = FEATURE_DIM_OUT if DETERMINISTIC else FEATURE_DIM_OUT // 2  # 4
S_DIM = LASER_DIM_OUT + FEATURE_DIM_OUT                          # 1448
R_COL = S_DIM                                                    # 1448
D_COL = S_DIM + 1                                                # 1449
N_TOTAL = S_DIM + 2                                              # 1450
N_PAD = ((N_TOTAL + 127) // 128) * 128                           # 1536

# tanh applies to the (permuted) laser columns:
TANH_LO0, TANH_HI0 = 0, HL                                       # [0, 720)
TANH_LO1, TANH_HI1 = HL + HF, HL + HF + (LASER_DIM_OUT - HL)     # [724, 1444)

BATCH_TILE = 128                        # batch-grid tile (multiple of 8 sublanes)
WEIGHT_DTYPE = jnp.bfloat16             # weight storage dtype (DMA-bound kernel)


# ----------------------------- Pallas kernel --------------------------------
def _model_kernel(state_ref, action_ref,
                  whs_ref, wha_ref, bh_ref,
                  wo_ref, bo_ref,
                  out_ref):
    # head: x = relu(state @ Ws + action @ Wa + bh)       [B, HIDDEN]
    # bf16 weights are up-cast in-register; accumulation stays f32.
    x = jnp.dot(state_ref[...], whs_ref[...].astype(jnp.float32),
                preferred_element_type=jnp.float32)
    x = x + jnp.dot(action_ref[...], wha_ref[...].astype(jnp.float32),
                    preferred_element_type=jnp.float32)
    x = jnp.maximum(x + bh_ref[...], 0.0)

    # fused, pre-permuted output heads: one lane-dense matmul [B, N_PAD]
    y = jnp.dot(x, wo_ref[...].astype(jnp.float32),
                preferred_element_type=jnp.float32) + bo_ref[...]

    # per-column activations via a static mask (no data movement).
    # done column: weights/bias were pre-scaled by 0.5, so
    #   sigmoid(z) == 0.5 * tanh(z/2) + 0.5 == 0.5 * tanh(y) + 0.5  (exact).
    cols = jax.lax.broadcasted_iota(jnp.int32, y.shape, 1)
    tanh_mask = ((cols >= TANH_LO0) & (cols < TANH_HI0)) | \
                ((cols >= TANH_LO1) & (cols < TANH_HI1))
    sig_mask = cols == D_COL
    t = jnp.tanh(y)
    out_ref[...] = jnp.where(sig_mask, 0.5 * t + 0.5,
                             jnp.where(tanh_mask, t, y))


# ------------------------------ model wrapper --------------------------------
def _nbytes(*arrs):
    return sum(int(a.size) * a.dtype.itemsize for a in arrs)


def model_forward_padded(state, action, fused_params):
    """Runs the fused kernel; returns the padded [B, N_PAD] output slab."""
    whs, wha, bh, wo, bo = fused_params
    B = state.shape[0]

    cost = pl.CostEstimate(
        flops=2 * B * (STATE_DIM_IN * HIDDEN + ACTION_DIM * HIDDEN + HIDDEN * N_PAD),
        transcendentals=B * N_PAD,
        bytes_accessed=_nbytes(state, action, whs, wha, bh, wo, bo) + B * N_PAD * 4,
    )

    if B % BATCH_TILE == 0 and B > BATCH_TILE:
        # Batched path: grid over batch tiles. Weight specs are constant-indexed
        # (DMA'd once, VMEM-resident); "parallel" lets v7x use both TensorCores.
        return pl.pallas_call(
            _model_kernel,
            out_shape=jax.ShapeDtypeStruct((B, N_PAD), jnp.float32),
            grid_spec=pltpu.PrefetchScalarGridSpec(
                num_scalar_prefetch=0,
                grid=(B // BATCH_TILE,),
                in_specs=[
                    pl.BlockSpec((BATCH_TILE, STATE_DIM_IN), lambda i: (i, 0)),
                    pl.BlockSpec((BATCH_TILE, ACTION_DIM), lambda i: (i, 0)),
                    pl.BlockSpec((STATE_DIM_IN, HIDDEN), lambda i: (0, 0)),
                    pl.BlockSpec((ACTION_DIM, HIDDEN), lambda i: (0, 0)),
                    pl.BlockSpec((1, HIDDEN), lambda i: (0, 0)),
                    pl.BlockSpec((HIDDEN, N_PAD), lambda i: (0, 0)),
                    pl.BlockSpec((1, N_PAD), lambda i: (0, 0)),
                ],
                out_specs=pl.BlockSpec((BATCH_TILE, N_PAD), lambda i: (i, 0)),
            ),
            compiler_params=pltpu.CompilerParams(
                dimension_semantics=("parallel",)),
            cost_estimate=cost,
        )(state, action, whs, wha, bh, wo, bo)

    # Small-batch path: gridless, single TC (correct choice at this size).
    vmem = pl.BlockSpec(memory_space=pltpu.MemorySpace.VMEM)
    return pl.pallas_call(
        _model_kernel,
        out_shape=jax.ShapeDtypeStruct((B, N_PAD), jnp.float32),
        in_specs=[vmem] * 7,
        out_specs=vmem,
        cost_estimate=cost,
    )(state, action, whs, wha, bh, wo, bo)


def model_forward(state, action, fused_params):
    """Reproduces Model.forward (state_preprocess=None, head=Linear+ReLU)."""
    out = model_forward_padded(state, action, fused_params)
    # These slices fuse inside the enclosing jit; latency-critical callers can
    # consume the padded slab directly via model_forward_padded.
    s = out[:, :S_DIM]
    r = out[:, R_COL:R_COL + 1]
    d = out[:, D_COL:D_COL + 1]
    return s, r, d


# ------------------------------ param init / fusion ---------------------------
def init_params(key):
    """Raw per-layer parameters (Linear layers: W [in, out], b [1, out])."""
    def linear(k, fan_in, fan_out):
        kw, kb = jax.random.split(k)
        bound = 1.0 / jnp.sqrt(fan_in)
        w = jax.random.uniform(kw, (fan_in, fan_out), jnp.float32, -bound, bound)
        b = jax.random.uniform(kb, (1, fan_out), jnp.float32, -bound, bound)
        return w, b

    keys = jax.random.split(key, 5)
    sa_dim = STATE_DIM_IN + ACTION_DIM
    wh, bh = linear(keys[0], sa_dim, HIDDEN)              # head
    wl, bl = linear(keys[1], HIDDEN, LASER_DIM_OUT)       # laser_state_fc
    wf, bf = linear(keys[2], HIDDEN, FEATURE_DIM_OUT)     # feature_state_fc
    wr, br = linear(keys[3], HIDDEN, 1)                   # reward_fc
    wd, bd = linear(keys[4], HIDDEN, 1)                   # done_fc
    return (wh, bh, wl, bl, wf, bf, wr, br, wd, bd)


def fuse_params(params):
    """One-time host-side fusion:
      * split head weight into state/action parts (folds the concat),
      * permute + pad output-head columns into the final interleaved order,
      * pre-scale done_fc by 0.5 (sigmoid-via-tanh),
      * store weight matrices in bf16 (biases stay f32)."""
    wh, bh, wl, bl, wf, bf, wr, br, wd, bd = params
    whs = wh[:STATE_DIM_IN]           # [724, HIDDEN]
    wha = wh[STATE_DIM_IN:]           # [2,   HIDDEN]
    wd_h, bd_h = 0.5 * wd, 0.5 * bd   # sigmoid(z) == 0.5*tanh(z/2) + 0.5
    pad_w = jnp.zeros((HIDDEN, N_PAD - N_TOTAL), jnp.float32)
    pad_b = jnp.zeros((1, N_PAD - N_TOTAL), jnp.float32)
    # columns in the final interleaved order: ls[:HL] | fs[:HF] | ls[HL:] | fs[HF:] | r | d
    wo = jnp.concatenate(
        [wl[:, :HL], wf[:, :HF], wl[:, HL:], wf[:, HF:], wr, wd_h, pad_w], axis=1)
    bo = jnp.concatenate(
        [bl[:, :HL], bf[:, :HF], bl[:, HL:], bf[:, HF:], br, bd_h, pad_b], axis=1)
    return (whs.astype(WEIGHT_DTYPE), wha.astype(WEIGHT_DTYPE),
            bh, wo.astype(WEIGHT_DTYPE), bo)


# ------------------------------ reference (pure JAX) --------------------------
def reference_forward(state, action, params, deterministic=DETERMINISTIC):
    wh, bh, wl, bl, wf, bf, wr, br, wd, bd = params
    sa = jnp.concatenate([state, action], axis=1)
    x = jnp.maximum(sa @ wh + bh, 0.0)
    ls = jnp.tanh(x @ wl + bl)
    fs = x @ wf + bf
    r = x @ wr + br
    d = jax.nn.sigmoid(x @ wd + bd)
    if deterministic:
        s = jnp.concatenate([ls, fs], axis=1)
    else:
        hl = LASER_DIM_OUT // 2
        hf = FEATURE_DIM_OUT // 2
        s = jnp.concatenate([ls[:, :hl], fs[:, :hf], ls[:, hl:], fs[:, hf:]], axis=1)
    return s, r, d


# ---------------------------------- main --------------------------------------
if __name__ == "__main__":
    key = jax.random.PRNGKey(0)
    k_state, k_action, k_params, k_big = jax.random.split(key, 4)

    params = init_params(k_params)
    fused = fuse_params(params)        # one-time; reused across calls

    fwd = jax.jit(model_forward)

    # bf16 weight storage: typical error ~1e-3, 3e-2 is a safe worst-case bound.
    TOL = dict(atol=3e-2, rtol=3e-2)

    # --- small batch (module-consistent B=2): gridless path ------------------
    state = jax.random.normal(k_state, (BATCH, STATE_DIM_IN), jnp.float32)
    action = jax.random.normal(k_action, (BATCH, ACTION_DIM), jnp.float32)
    s, r, d = fwd(state, action, fused)
    jax.block_until_ready((s, r, d))

    s_ref, r_ref, d_ref = reference_forward(state, action, params)
    assert s.shape == (BATCH, S_DIM)
    assert r.shape == (BATCH, 1) and d.shape == (BATCH, 1)
    assert jnp.allclose(s, s_ref, **TOL)
    assert jnp.allclose(r, r_ref, **TOL)
    assert jnp.allclose(d, d_ref, **TOL)

    # --- batched path: batch grid, resident weights, both v7x TCs ------------
    BIG = 2 * BATCH_TILE
    ks, ka = jax.random.split(k_big)
    state_b = jax.random.normal(ks, (BIG, STATE_DIM_IN), jnp.float32)
    action_b = jax.random.normal(ka, (BIG, ACTION_DIM), jnp.float32)
    sb, rb, db = fwd(state_b, action_b, fused)
    jax.block_until_ready((sb, rb, db))

    sb_ref, rb_ref, db_ref = reference_forward(state_b, action_b, params)
    assert sb.shape == (BIG, S_DIM)
    assert jnp.allclose(sb, sb_ref, **TOL)
    assert jnp.allclose(rb, rb_ref, **TOL)
    assert jnp.allclose(db, db_ref, **TOL)

    print("KERNEL_OK")
</pallas_src>

<mosaic_0001>
module attributes {stable_mosaic.version = 11 : i64} {
  func.func @_model_kernel(%arg0: memref<2x724xf32, #tpu.memory_space<vmem>>, %arg1: memref<2x2xf32, #tpu.memory_space<vmem>>, %arg2: memref<724x64xbf16, #tpu.memory_space<vmem>>, %arg3: memref<2x64xbf16, #tpu.memory_space<vmem>>, %arg4: memref<1x64xf32, #tpu.memory_space<vmem>>, %arg5: memref<64x1536xbf16, #tpu.memory_space<vmem>>, %arg6: memref<1x1536xf32, #tpu.memory_space<vmem>>, %arg7: memref<2x1536xf32, #tpu.memory_space<vmem>>) attributes {dimension_semantics = [], scalar_prefetch = 0 : i64, scratch_operands = 0 : i64, tpu.core_type = #tpu.core_type<tc>} {
    %c0 = arith.constant 0 : index
    %c0_0 = arith.constant 0 : index
    %0 = vector.load %arg0[%c0, %c0_0] : memref<2x724xf32, #tpu.memory_space<vmem>>, vector<2x724xf32>
    %c0_1 = arith.constant 0 : index
    %c0_2 = arith.constant 0 : index
    %1 = vector.load %arg2[%c0_1, %c0_2] : memref<724x64xbf16, #tpu.memory_space<vmem>>, vector<724x64xbf16>
    %2 = arith.extf %1 : vector<724x64xbf16> to vector<724x64xf32>
    %cst = arith.constant dense<0.000000e+00> : vector<2x64xf32>
    %3 = tpu.matmul %0, %2, %cst {dimension_numbers = #tpu.dot_dimension_numbers<[1], [0], [0], [1], [0, 0, 1, 1], [], []>} : vector<2x724xf32>, vector<724x64xf32>, vector<2x64xf32> -> vector<2x64xf32>
    %c0_3 = arith.constant 0 : index
    %c0_4 = arith.constant 0 : index
    %4 = vector.load %arg1[%c0_3, %c0_4] : memref<2x2xf32, #tpu.memory_space<vmem>>, vector<2x2xf32>
    %c0_5 = arith.constant 0 : index
    %c0_6 = arith.constant 0 : index
    %5 = vector.load %arg3[%c0_5, %c0_6] : memref<2x64xbf16, #tpu.memory_space<vmem>>, vector<2x64xbf16>
    %6 = arith.extf %5 : vector<2x64xbf16> to vector<2x64xf32>
    %cst_7 = arith.constant dense<0.000000e+00> : vector<2x64xf32>
    %7 = tpu.matmul %4, %6, %cst_7 {dimension_numbers = #tpu.dot_dimension_numbers<[1], [0], [0], [1], [0, 0, 1, 1], [], []>} : vector<2x2xf32>, vector<2x64xf32>, vector<2x64xf32> -> vector<2x64xf32>
    %8 = arith.addf %3, %7 : vector<2x64xf32>
    %c0_8 = arith.constant 0 : index
    %c0_9 = arith.constant 0 : index
    %9 = vector.load %arg4[%c0_8, %c0_9] : memref<1x64xf32, #tpu.memory_space<vmem>>, vector<1x64xf32>
    %10 = vector.broadcast %9 : vector<1x64xf32> to vector<2x64xf32>
    %11 = arith.addf %8, %10 : vector<2x64xf32>
    %cst_10 = arith.constant 0.000000e+00 : f32
    %12 = vector.broadcast %cst_10 : f32 to vector<2x64xf32>
    %13 = arith.maximumf %11, %12 : vector<2x64xf32>
    %c0_11 = arith.constant 0 : index
    %c0_12 = arith.constant 0 : index
    %14 = vector.load %arg5[%c0_11, %c0_12] : memref<64x1536xbf16, #tpu.memory_space<vmem>>, vector<64x1536xbf16>
    %15 = arith.extf %14 : vector<64x1536xbf16> to vector<64x1536xf32>
    %cst_13 = arith.constant dense<0.000000e+00> : vector<2x1536xf32>
    %16 = tpu.matmul %13, %15, %cst_13 {dimension_numbers = #tpu.dot_dimension_numbers<[1], [0], [0], [1], [0, 0, 1, 1], [], []>} : vector<2x64xf32>, vector<64x1536xf32>, vector<2x1536xf32> -> vector<2x1536xf32>
    %c0_14 = arith.constant 0 : index
    %c0_15 = arith.constant 0 : index
    %17 = vector.load %arg6[%c0_14, %c0_15] : memref<1x1536xf32, #tpu.memory_space<vmem>>, vector<1x1536xf32>
    %18 = vector.broadcast %17 : vector<1x1536xf32> to vector<2x1536xf32>
    %19 = arith.addf %16, %18 : vector<2x1536xf32>
    %20 = tpu.iota {dimensions = array<i32: 1>} : vector<2x1536xi32>
    %c0_i32 = arith.constant 0 : i32
    %21 = vector.broadcast %c0_i32 : i32 to vector<2x1536xi32>
    %22 = arith.cmpi sge, %20, %21 : vector<2x1536xi32>
    %c720_i32 = arith.constant 720 : i32
    %23 = vector.broadcast %c720_i32 : i32 to vector<2x1536xi32>
    %24 = arith.cmpi slt, %20, %23 : vector<2x1536xi32>
    %25 = arith.andi %22, %24 : vector<2x1536xi1>
    %c724_i32 = arith.constant 724 : i32
    %26 = vector.broadcast %c724_i32 : i32 to vector<2x1536xi32>
    %27 = arith.cmpi sge, %20, %26 : vector<2x1536xi32>
    %c1444_i32 = arith.constant 1444 : i32
    %28 = vector.broadcast %c1444_i32 : i32 to vector<2x1536xi32>
    %29 = arith.cmpi slt, %20, %28 : vector<2x1536xi32>
    %30 = arith.andi %27, %29 : vector<2x1536xi1>
    %31 = arith.ori %25, %30 : vector<2x1536xi1>
    %c1449_i32 = arith.constant 1449 : i32
    %32 = vector.broadcast %c1449_i32 : i32 to vector<2x1536xi32>
    %33 = arith.cmpi eq, %20, %32 : vector<2x1536xi32>
    %34 = math.tanh %19 : vector<2x1536xf32>
    %cst_16 = arith.constant 5.000000e-01 : f32
    %35 = vector.broadcast %cst_16 : f32 to vector<2x1536xf32>
    %36 = arith.mulf %35, %34 : vector<2x1536xf32>
    %cst_17 = arith.constant 5.000000e-01 : f32
    %37 = vector.broadcast %cst_17 : f32 to vector<2x1536xf32>
    %38 = arith.addf %36, %37 : vector<2x1536xf32>
    %39 = arith.select %31, %34, %19 : vector<2x1536xi1>, vector<2x1536xf32>
    %40 = arith.select %33, %38, %39 : vector<2x1536xi1>, vector<2x1536xf32>
    %c0_18 = arith.constant 0 : index
    %c0_19 = arith.constant 0 : index
    %41 = vector.load %arg7[%c0_18, %c0_19] : memref<2x1536xf32, #tpu.memory_space<vmem>>, vector<2x1536xf32>
    tpu.vector_store %arg7[%c0_18, %c0_19], %40 {strides = array<i32>} : memref<2x1536xf32, #tpu.memory_space<vmem>>, vector<2x1536xf32>,
    return
  }
}

</mosaic_0001>

<llo_original>
// kernel: model_forward.1
$region0: #{model_forward.1}
  #allocation0 [shape = 'u32[]', space=smem, size = 0x4, offset = 0x4, fixed_abs, tag = 'smem constant byte address 0x4 - core index']
  #allocation1 [shape = 'u32[144,128]{1,0:T(1,128)}', space=vmem, size = 0x12000, scoped, tag = 'internal scratch']
  %s0 = inlined_call_operand.vmem [shape: f32[2,724], index: 0, kind: input, shape index: {}]
  %s1 = inlined_call_operand.vmem [shape: f32[2,2], index: 1, kind: input, shape index: {}]
  %s2 = inlined_call_operand.vmem [shape: bf16[724,64], index: 2, kind: input, shape index: {}]
  %s3 = inlined_call_operand.vmem [shape: bf16[2,64], index: 3, kind: input, shape index: {}]
  %s4 = inlined_call_operand.vmem [shape: f32[1,64], index: 4, kind: input, shape index: {}]
  %s5 = inlined_call_operand.vmem [shape: bf16[64,1536], index: 5, kind: input, shape index: {}]
  %s6 = inlined_call_operand.vmem [shape: f32[1,1536], index: 6, kind: input, shape index: {}]
  %s7 = inlined_call_operand.vmem [shape: f32[2,1536], index: 7, kind: output, shape index: {}]
  %s8 = sld [smem:[#allocation0]]
  $region38: #{model_forward.1} parent=0
    _
  %s10 = ssub.s32 1, %s8
  %s11 = scalar_select 0, %s10, %s8
  // Predicated region
  $region2: #{model_forward.1} parent=0 // pred_check
    _
  $region3: #{model_forward.1} parent=0 // pred_check_branch
    %13 = sbr.rel (0) target = $region5
  $region4: #{model_forward.1} parent=0 // pred_region
    _
  $region5: #{model_forward.1} parent=0 // pred_fallthru
    _
  // Predicated region
  $region6: #{model_forward.1} parent=0 // pred_check
    _
  $region7: #{model_forward.1} parent=0 // pred_check_branch
    %15 = sbr.rel (0) target = $region9
  $region8: #{model_forward.1} parent=0 // pred_region
    _
  $region9: #{model_forward.1} parent=0 // pred_fallthru
    _
  // Predicated region
  $region10: #{model_forward.1} parent=0 // pred_check
    _
  $region11: #{model_forward.1} parent=0 // pred_check_branch
    %17 = sbr.rel (0) target = $region13
  $region12: #{model_forward.1} parent=0 // pred_region
    _
  $region13: #{model_forward.1} parent=0 // pred_fallthru
    _
  // Predicated region
  $region14: #{model_forward.1} parent=0 // pred_check
    _
  $region15: #{model_forward.1} parent=0 // pred_check_branch
    %19 = sbr.rel (0) target = $region17
  $region16: #{model_forward.1} parent=0 // pred_region
    _
  $region17: #{model_forward.1} parent=0 // pred_fallthru
    _
  // Predicated region
  $region18: #{model_forward.1} parent=0 // pred_check
    _
  $region19: #{model_forward.1} parent=0 // pred_check_branch
    %21 = sbr.rel (0) target = $region21
  $region20: #{model_forward.1} parent=0 // pred_region
    _
  $region21: #{model_forward.1} parent=0 // pred_fallthru
    _
  // Predicated region
  $region22: #{model_forward.1} parent=0 // pred_check
    _
  $region23: #{model_forward.1} parent=0 // pred_check_branch
    %23 = sbr.rel (0) target = $region25
  $region24: #{model_forward.1} parent=0 // pred_region
    _
  $region25: #{model_forward.1} parent=0 // pred_fallthru
    _
  // Predicated region
  $region26: #{model_forward.1} parent=0 // pred_check
    _
  $region27: #{model_forward.1} parent=0 // pred_check_branch
    %25 = sbr.rel (0) target = $region29
  $region28: #{model_forward.1} parent=0 // pred_region
    _
  $region29: #{model_forward.1} parent=0 // pred_fallthru
    _
  %v26 = vld [vmem:[%s0] sm:$0xff]
  %v27 = vld [vmem:[%s0 + $0x8] sm:$0xf]
  %v28 = vld [vmem:[%s2] sm:$0xf]
  %v29 = vld [vmem:[%s2 + $0x4] sm:$0xf]
  %v30 = vld [vmem:[%s2 + $0x8] sm:$0xf]
  %v31 = vld [vmem:[%s2 + $0xc] sm:$0xf]
  %v32 = vld [vmem:[%s2 + $0x10] sm:$0xf]
  %v33 = vld [vmem:[%s2 + $0x14] sm:$0xf]
  %v34 = vld [vmem:[%s2 + $0x18] sm:$0xf]
  %v35 = vld [vmem:[%s2 + $0x1c] sm:$0xf]
  %v36 = vld [vmem:[%s2 + $0x20] sm:$0xf]
  %v37 = vld [vmem:[%s2 + $0x24] sm:$0xf]
  %v38 = vld [vmem:[%s2 + $0x28] sm:$0xf]
  %v39 = vld [vmem:[%s2 + $0x2c] sm:$0xf]
  %v40 = vld [vmem:[%s2 + $0x30] sm:$0xf]
  %v41 = vld [vmem:[%s2 + $0x34] sm:$0xf]
  %v42 = vld [vmem:[%s2 + $0x38] sm:$0xf]
  %v43 = vld [vmem:[%s2 + $0x3c] sm:$0xf]
  %v44 = vld [vmem:[%s2 + $0x40] sm:$0xf]
  %v45 = vld [vmem:[%s2 + $0x44] sm:$0xf]
  %v46 = vld [vmem:[%s2 + $0x48] sm:$0xf]
  %v47 = vld [vmem:[%s2 + $0x4c] sm:$0xf]
  %v48 = vld [vmem:[%s2 + $0x50] sm:$0xf]
  %v49 = vld [vmem:[%s2 + $0x54] sm:$0xf]
  %v50 = vld [vmem:[%s2 + $0x58] sm:$0xf]
  %v51 = vld [vmem:[%s2 + $0x5c] sm:$0xf]
  %v52 = vld [vmem:[%s2 + $0x60] sm:$0xf]
  %v53 = vld [vmem:[%s2 + $0x64] sm:$0xf]
  %v54 = vld [vmem:[%s2 + $0x68] sm:$0xf]
  %v55 = vld [vmem:[%s2 + $0x6c] sm:$0xf]
  %v56 = vld [vmem:[%s2 + $0x70] sm:$0xf]
  %v57 = vld [vmem:[%s2 + $0x74] sm:$0xf]
  %v58 = vld [vmem:[%s2 + $0x78] sm:$0xf]
  %v59 = vld [vmem:[%s2 + $0x7c] sm:$0xf]
  %v60 = vld [vmem:[%s2 + $0x80] sm:$0xf]
  %v61 = vld [vmem:[%s2 + $0x84] sm:$0xf]
  %v62 = vld [vmem:[%s2 + $0x88] sm:$0xf]
  %v63 = vld [vmem:[%s2 + $0x8c] sm:$0xf]
  %v64 = vld [vmem:[%s2 + $0x90] sm:$0xf]
  %v65 = vld [vmem:[%s2 + $0x94] sm:$0xf]
  %v66 = vld [vmem:[%s2 + $0x98] sm:$0xf]
  %v67 = vld [vmem:[%s2 + $0x9c] sm:$0xf]
  %v68 = vld [vmem:[%s2 + $0xa0] sm:$0xf]
  %v69 = vld [vmem:[%s2 + $0xa4] sm:$0xf]
  %v70 = vld [vmem:[%s2 + $0xa8] sm:$0xf]
  %v71 = vld [vmem:[%s2 + $0xac] sm:$0xf]
  %v72 = vld [vmem:[%s2 + $0xb0] sm:$0xf]
  %v73 = vld [vmem:[%s2 + $0xb4] sm:$0xf]
  %v74 = vld [vmem:[%s2 + $0xb8] sm:$0xf]
  %v75 = vld [vmem:[%s2 + $0xbc] sm:$0xf]
  %v76 = vld [vmem:[%s2 + $0xc0] sm:$0xf]
  %v77 = vld [vmem:[%s2 + $0xc4] sm:$0xf]
  %v78 = vld [vmem:[%s2 + $0xc8] sm:$0xf]
  %v79 = vld [vmem:[%s2 + $0xcc] sm:$0xf]
  %v80 = vld [vmem:[%s2 + $0xd0] sm:$0xf]
  %v81 = vld [vmem:[%s2 + $0xd4] sm:$0xf]
  %v82 = vld [vmem:[%s2 + $0xd8] sm:$0xf]
  %v83 = vld [vmem:[%s2 + $0xdc] sm:$0xf]
  %v84 = vld [vmem:[%s2 + $0xe0] sm:$0xf]
  %v85 = vld [vmem:[%s2 + $0xe4] sm:$0xf]
  %v86 = vld [vmem:[%s2 + $0xe8] sm:$0xf]
  %v87 = vld [vmem:[%s2 + $0xec] sm:$0xf]
  %v88 = vld [vmem:[%s2 + $0xf0] sm:$0xf]
  %v89 = vld [vmem:[%s2 + $0xf4] sm:$0xf]
  %v90 = vld [vmem:[%s2 + $0xf8] sm:$0xf]
  %v91 = vld [vmem:[%s2 + $0xfc] sm:$0xf]
  %v92 = vld [vmem:[%s2 + $0x100] sm:$0xf]
  %v93 = vld [vmem:[%s2 + $0x104] sm:$0xf]
  %v94 = vld [vmem:[%s2 + $0x108] sm:$0xf]
  %v95 = vld [vmem:[%s2 + $0x10c] sm:$0xf]
  %v96 = vld [vmem:[%s2 + $0x110] sm:$0xf]
  %v97 = vld [vmem:[%s2 + $0x114] sm:$0xf]
  %v98 = vld [vmem:[%s2 + $0x118] sm:$0xf]
  %v99 = vld [vmem:[%s2 + $0x11c] sm:$0xf]
  %v100 = vld [vmem:[%s2 + $0x120] sm:$0xf]
  %v101 = vld [vmem:[%s2 + $0x124] sm:$0xf]
  %v102 = vld [vmem:[%s2 + $0x128] sm:$0xf]
  %v103 = vld [vmem:[%s2 + $0x12c] sm:$0xf]
  %v104 = vld [vmem:[%s2 + $0x130] sm:$0xf]
  %v105 = vld [vmem:[%s2 + $0x134] sm:$0xf]
  %v106 = vld [vmem:[%s2 + $0x138] sm:$0xf]
  %v107 = vld [vmem:[%s2 + $0x13c] sm:$0xf]
  %v108 = vld [vmem:[%s2 + $0x140] sm:$0xf]
  %v109 = vld [vmem:[%s2 + $0x144] sm:$0xf]
  %v110 = vld [vmem:[%s2 + $0x148] sm:$0xf]
  %v111 = vld [vmem:[%s2 + $0x14c] sm:$0xf]
  %v112 = vld [vmem:[%s2 + $0x150] sm:$0xf]
  %v113 = vld [vmem:[%s2 + $0x154] sm:$0xf]
  %v114 = vld [vmem:[%s2 + $0x158] sm:$0xf]
  %v115 = vld [vmem:[%s2 + $0x15c] sm:$0xf]
  %v116 = vld [vmem:[%s2 + $0x160] sm:$0xf]
  %v117 = vld [vmem:[%s2 + $0x164] sm:$0xf]
  %v118 = vld [vmem:[%s2 + $0x168] sm:$0x3]
  %v119 = vunpack.c.l.bf16 %v28
  %v120 = vunpack.c.l.bf16 %v29
  %v121 = vunpack.c.l.bf16 %v30
  %v122 = vunpack.c.l.bf16 %v31
  %v123 = vunpack.c.l.bf16 %v32
  %v124 = vunpack.c.l.bf16 %v33
  %v125 = vunpack.c.l.bf16 %v34
  %v126 = vunpack.c.l.bf16 %v35
  %v127 = vunpack.c.l.bf16 %v36
  %v128 = vunpack.c.l.bf16 %v37
  %v129 = vunpack.c.l.bf16 %v38
  %v130 = vunpack.c.l.bf16 %v39
  %v131 = vunpack.c.l.bf16 %v40
  %v132 = vunpack.c.l.bf16 %v41
  %v133 = vunpack.c.l.bf16 %v42
  %v134 = vunpack.c.l.bf16 %v43
  %v135 = vunpack.c.l.bf16 %v44
  %v136 = vunpack.c.l.bf16 %v45
  %v137 = vunpack.c.l.bf16 %v46
  %v138 = vunpack.c.l.bf16 %v47
  %v139 = vunpack.c.l.bf16 %v48
  %v140 = vunpack.c.l.bf16 %v49
  %v141 = vunpack.c.l.bf16 %v50
  %v142 = vunpack.c.l.bf16 %v51
  %v143 = vunpack.c.l.bf16 %v52
  %v144 = vunpack.c.l.bf16 %v53
  %v145 = vunpack.c.l.bf16 %v54
  %v146 = vunpack.c.l.bf16 %v55
  %v147 = vunpack.c.l.bf16 %v56
  %v148 = vunpack.c.l.bf16 %v57
  %v149 = vunpack.c.l.bf16 %v58
  %v150 = vunpack.c.l.bf16 %v59
  %v151 = vunpack.c.l.bf16 %v60
  %v152 = vunpack.c.l.bf16 %v61
  %v153 = vunpack.c.l.bf16 %v62
  %v154 = vunpack.c.l.bf16 %v63
  %v155 = vunpack.c.l.bf16 %v64
  %v156 = vunpack.c.l.bf16 %v65
  %v157 = vunpack.c.l.bf16 %v66
  %v158 = vunpack.c.l.bf16 %v67
  %v159 = vunpack.c.l.bf16 %v68
  %v160 = vunpack.c.l.bf16 %v69
  %v161 = vunpack.c.l.bf16 %v70
  %v162 = vunpack.c.l.bf16 %v71
  %v163 = vunpack.c.l.bf16 %v72
  %v164 = vunpack.c.l.bf16 %v73
  %v165 = vunpack.c.l.bf16 %v74
  %v166 = vunpack.c.l.bf16 %v75
  %v167 = vunpack.c.l.bf16 %v76
  %v168 = vunpack.c.l.bf16 %v77
  %v169 = vunpack.c.l.bf16 %v78
  %v170 = vunpack.c.l.bf16 %v79
  %v171 = vunpack.c.l.bf16 %v80
  %v172 = vunpack.c.l.bf16 %v81
  %v173 = vunpack.c.l.bf16 %v82
  %v174 = vunpack.c.l.bf16 %v83
  %v175 = vunpack.c.l.bf16 %v84
  %v176 = vunpack.c.l.bf16 %v85
  %v177 = vunpack.c.l.bf16 %v86
  %v178 = vunpack.c.l.bf16 %v87
  %v179 = vunpack.c.l.bf16 %v88
  %v180 = vunpack.c.l.bf16 %v89
  %v181 = vunpack.c.l.bf16 %v90
  %v182 = vunpack.c.l.bf16 %v91
  %v183 = vunpack.c.l.bf16 %v92
  %v184 = vunpack.c.l.bf16 %v93
  %v185 = vunpack.c.l.bf16 %v94
  %v186 = vunpack.c.l.bf16 %v95
  %v187 = vunpack.c.l.bf16 %v96
  %v188 = vunpack.c.l.bf16 %v97
  %v189 = vunpack.c.l.bf16 %v98
  %v190 = vunpack.c.l.bf16 %v99
  %v191 = vunpack.c.l.bf16 %v100
  %v192 = vunpack.c.l.bf16 %v101
  %v193 = vunpack.c.l.bf16 %v102
  %v194 = vunpack.c.l.bf16 %v103
  %v195 = vunpack.c.l.bf16 %v104
  %v196 = vunpack.c.l.bf16 %v105
  %v197 = vunpack.c.l.bf16 %v106
  %v198 = vunpack.c.l.bf16 %v107
  %v199 = vunpack.c.l.bf16 %v108
  %v200 = vunpack.c.l.bf16 %v109
  %v201 = vunpack.c.l.bf16 %v110
  %v202 = vunpack.c.l.bf16 %v111
  %v203 = vunpack.c.l.bf16 %v112
  %v204 = vunpack.c.l.bf16 %v113
  %v205 = vunpack.c.l.bf16 %v114
  %v206 = vunpack.c.l.bf16 %v115
  %v207 = vunpack.c.l.bf16 %v116
  %v208 = vunpack.c.l.bf16 %v117
  %v209 = vunpack.c.l.bf16 %v118
  %v210 = vld [vmem:[%s1] sm:$0x3]
  %v211 = vld [vmem:[%s3] sm:$0x1]
  %v212 = vunpack.c.l.bf16 %v211
  %vm213 = vcmask 15360
  %v215 = vsel %vm213, %v210, 0
  %vm217 = vcmask 1041408
  %v219 = vsel %vm217, %v212, 0
  %221 = vmatprep.subr.mxu0 0.0
  %222 = vmatpush1.msra.mxu0 %v219
  %223 = vmatprep.subr.mxu0 0.0
  %224 = vmatpush1.msra.mxu0 0.0
  %225 = vmatprep.subr.mxu0 0.0
  %226 = vmatpush1.msra.mxu0 0.0
  %227 = vmatprep.subr.mxu0 0.0
  %228 = vmatpush1.msra.mxu0 0.0
  %229 = vmatprep.subr.mxu0 0.0
  %230 = vmatpush1.msra.mxu0 0.0
  %231 = vmatprep.subr.mxu0 0.0
  %232 = vmatpush1.msra.mxu0 0.0
  %233 = vmatprep.subr.mxu0 0.0
  %234 = vmatpush1.msra.mxu0 0.0
  %235 = vmatprep.subr.mxu0 0.0
  %236 = vmatpush1.msra.mxu0 0.0
  %237 = vmatprep.subr.mxu0 0.0
  %238 = vmatpush1.msra.mxu0 0.0
  %239 = vmatprep.subr.mxu0 0.0
  %240 = vmatpush1.msra.mxu0 0.0
  %241 = vmatprep.subr.mxu0 0.0
  %242 = vmatpush1.msra.mxu0 0.0
  %243 = vmatprep.subr.mxu0 0.0
  %244 = vmatpush1.msra.mxu0 0.0
  %245 = vmatprep.subr.mxu0 0.0
  %246 = vmatpush1.msra.mxu0 0.0
  %247 = vmatprep.subr.mxu0 0.0
  %248 = vmatpush1.msra.mxu0 0.0
  %249 = vmatprep.subr.mxu0 0.0
  %250 = vmatpush1.msra.mxu0 0.0
  %251 = vmatprep.subr.mxu0 0.0
  %252 = vmatpush1.msra.mxu0 0.0
  %253 = vmatprep.subr.mxu0 0.0
  %254 = vmatpush1.msra.mxu0 0.0
  %255 = vmatprep.subr.mxu0 0.0
  %256 = vmatpush1.msra.mxu0 0.0
  %257 = vmatprep.subr.mxu0 0.0
  %258 = vmatpush1.msra.mxu0 0.0
  %259 = vmatprep.subr.mxu0 0.0
  %260 = vmatpush1.msra.mxu0 0.0
  %261 = vmatprep.subr.mxu0 0.0
  %262 = vmatpush1.msra.mxu0 0.0
  %263 = vmatprep.subr.mxu0 0.0
  %264 = vmatpush1.msra.mxu0 0.0
  %265 = vmatprep.subr.mxu0 0.0
  %266 = vmatpush1.msra.mxu0 0.0
  %267 = vmatprep.subr.mxu0 0.0
  %268 = vmatpush1.msra.mxu0 0.0
  %269 = vmatprep.subr.mxu0 0.0
  %270 = vmatpush1.msra.mxu0 0.0
  %271 = vmatprep.subr.mxu0 0.0
  %272 = vmatpush1.msra.mxu0 0.0
  %273 = vmatprep.subr.mxu0 0.0
  %274 = vmatpush1.msra.mxu0 0.0
  %275 = vmatprep.subr.mxu0 0.0
  %276 = vmatpush1.msra.mxu0 0.0
  %277 = vmatprep.subr.mxu0 0.0
  %278 = vmatpush1.msra.mxu0 0.0
  %279 = vmatprep.subr.mxu0 0.0
  %280 = vmatpush1.msra.mxu0 0.0
  %281 = vmatprep.subr.mxu0 0.0
  %282 = vmatpush1.msra.mxu0 0.0
  %283 = vmatprep.subr.mxu0 0.0
  %284 = vmatpush1.msra.mxu0 0.0
  %285 = vmatprep.mubr.f32.mxu0 0.0
  %286 = vmatmul.mubr.f32.gmra.mrb[0].mxu0 %v215
  %v287 = vpop.f32.mrb[0].mxu0
  %v288 = vadd.f32 0.0, %v287
  %v289 = vpop.f32.mrb[0].mxu0
  %290 = vdwg.mxu0
  %v293 = vcombine.high %v26, %v26
  %v295 = vunpack.c.l.s4 1983009808
  %v296 = vunpack.c.0.s8 %v295
  %v297 = vlaneseq
  %v298 = vshrl.u32 %v297, 7
  %v299 = vsub.s32 %v296, %v298
  %v300 = vrot.slane %v26, %v299
  %v302 = vunpack.c.l.s4 1983009808
  %v303 = vunpack.c.0.s8 %v302
  %v304 = vlaneseq
  %v305 = vshrl.u32 %v304, 7
  %v306 = vsub.s32 %v303, %v305
  %v307 = vrot.slane %v293, %v306
  %v308 = vcombine.high %v300, %v300
  %v309 = vcombine.high %v307, %v307
  %v311 = vunpack.c.l.s4 1983009808
  %v312 = vunpack.c.0.s8 %v311
  %v313 = vlaneseq
  %v314 = vshrl.u32 %v313, 7
  %v315 = vsub.s32 %v312, %v314
  %v316 = vrot.slane %v27, %v315
  %v317 = vcombine.high %v316, %v316
  %vm323 = vcmask 687104
  %v324 = vsel %vm323, %v317, 0
  %vm326 = vcmask 1043456
  %v328 = vsel %vm326, %v209, 0
  %330 = vmatprep.subr.mxu0 0.0
  %331 = vmatpush1.msra.mxu0 %v119
  %332 = vmatprep.subr.mxu0 0.0
  %333 = vmatpush1.msra.mxu0 %v120
  %334 = vmatprep.subr.mxu0 0.0
  %335 = vmatpush1.msra.mxu0 %v121
  %336 = vmatprep.subr.mxu0 0.0
  %337 = vmatpush1.msra.mxu0 %v122
  %338 = vmatprep.subr.mxu0 0.0
  %339 = vmatpush1.msra.mxu0 %v123
  %340 = vmatprep.subr.mxu0 0.0
  %341 = vmatpush1.msra.mxu0 %v124
  %342 = vmatprep.subr.mxu0 0.0
  %343 = vmatpush1.msra.mxu0 %v125
  %344 = vmatprep.subr.mxu0 0.0
  %345 = vmatpush1.msra.mxu0 %v126
  %346 = vmatprep.subr.mxu0 0.0
  %347 = vmatpush1.msra.mxu0 %v127
  %348 = vmatprep.subr.mxu0 0.0
  %349 = vmatpush1.msra.mxu0 %v128
  %350 = vmatprep.subr.mxu0 0.0
  %351 = vmatpush1.msra.mxu0 %v129
  %352 = vmatprep.subr.mxu0 0.0
  %353 = vmatpush1.msra.mxu0 %v130
  %354 = vmatprep.subr.mxu0 0.0
  %355 = vmatpush1.msra.mxu0 %v131
  %356 = vmatprep.subr.mxu0 0.0
  %357 = vmatpush1.msra.mxu0 %v132
  %358 = vmatprep.subr.mxu0 0.0
  %359 = vmatpush1.msra.mxu0 %v133
  %360 = vmatprep.subr.mxu0 0.0
  %361 = vmatpush1.msra.mxu0 %v134
  %362 = vmatprep.subr.mxu0 0.0
  %363 = vmatpush1.msra.mxu0 %v135
  %364 = vmatprep.subr.mxu0 0.0
  %365 = vmatpush1.msra.mxu0 %v136
  %366 = vmatprep.subr.mxu0 0.0
  %367 = vmatpush1.msra.mxu0 %v137
  %368 = vmatprep.subr.mxu0 0.0
  %369 = vmatpush1.msra.mxu0 %v138
  %370 = vmatprep.subr.mxu0 0.0
  %371 = vmatpush1.msra.mxu0 %v139
  %372 = vmatprep.subr.mxu0 0.0
  %373 = vmatpush1.msra.mxu0 %v140
  %374 = vmatprep.subr.mxu0 0.0
  %375 = vmatpush1.msra.mxu0 %v141
  %376 = vmatprep.subr.mxu0 0.0
  %377 = vmatpush1.msra.mxu0 %v142
  %378 = vmatprep.subr.mxu0 0.0
  %379 = vmatpush1.msra.mxu0 %v143
  %380 = vmatprep.subr.mxu0 0.0
  %381 = vmatpush1.msra.mxu0 %v144
  %382 = vmatprep.subr.mxu0 0.0
  %383 = vmatpush1.msra.mxu0 %v145
  %384 = vmatprep.subr.mxu0 0.0
  %385 = vmatpush1.msra.mxu0 %v146
  %386 = vmatprep.subr.mxu0 0.0
  %387 = vmatpush1.msra.mxu0 %v147
  %388 = vmatprep.subr.mxu0 0.0
  %389 = vmatpush1.msra.mxu0 %v148
  %390 = vmatprep.subr.mxu0 0.0
  %391 = vmatpush1.msra.mxu0 %v149
  %392 = vmatprep.subr.mxu0 0.0
  %393 = vmatpush1.msra.mxu0 %v150
  %394 = vmatprep.mubr.f32.mxu0 %v308
  %395 = vmatmul.mubr.f32.gmra.mrb[0].mxu0 %v300
  %v396 = vpop.f32.mrb[0].mxu0
  %v397 = vadd.f32 %v288, %v396
  %v398 = vpop.f32.mrb[0].mxu0
  %399 = vdwg.mxu0
  %400 = vmatprep.subr.mxu0 0.0
  %401 = vmatpush1.msra.mxu0 %v151
  %402 = vmatprep.subr.mxu0 0.0
  %403 = vmatpush1.msra.mxu0 %v152
  %404 = vmatprep.subr.mxu0 0.0
  %405 = vmatpush1.msra.mxu0 %v153
  %406 = vmatprep.subr.mxu0 0.0
  %407 = vmatpush1.msra.mxu0 %v154
  %408 = vmatprep.subr.mxu0 0.0
  %409 = vmatpush1.msra.mxu0 %v155
  %410 = vmatprep.subr.mxu0 0.0
  %411 = vmatpush1.msra.mxu0 %v156
  %412 = vmatprep.subr.mxu0 0.0
  %413 = vmatpush1.msra.mxu0 %v157
  %414 = vmatprep.subr.mxu0 0.0
  %415 = vmatpush1.msra.mxu0 %v158
  %416 = vmatprep.subr.mxu0 0.0
  %417 = vmatpush1.msra.mxu0 %v159
  %418 = vmatprep.subr.mxu0 0.0
  %419 = vmatpush1.msra.mxu0 %v160
  %420 = vmatprep.subr.mxu0 0.0
  %421 = vmatpush1.msra.mxu0 %v161
  %422 = vmatprep.subr.mxu0 0.0
  %423 = vmatpush1.msra.mxu0 %v162
  %424 = vmatprep.subr.mxu0 0.0
  %425 = vmatpush1.msra.mxu0 %v163
  %426 = vmatprep.subr.mxu0 0.0
  %427 = vmatpush1.msra.mxu0 %v164
  %428 = vmatprep.subr.mxu0 0.0
  %429 = vmatpush1.msra.mxu0 %v165
  %430 = vmatprep.subr.mxu0 0.0
  %431 = vmatpush1.msra.mxu0 %v166
  %432 = vmatprep.subr.mxu0 0.0
  %433 = vmatpush1.msra.mxu0 %v167
  %434 = vmatprep.subr.mxu0 0.0
  %435 = vmatpush1.msra.mxu0 %v168
  %436 = vmatprep.subr.mxu0 0.0
  %437 = vmatpush1.msra.mxu0 %v169
  %438 = vmatprep.subr.mxu0 0.0
  %439 = vmatpush1.msra.mxu0 %v170
  %440 = vmatprep.subr.mxu0 0.0
  %441 = vmatpush1.msra.mxu0 %v171
  %442 = vmatprep.subr.mxu0 0.0
  %443 = vmatpush1.msra.mxu0 %v172
  %444 = vmatprep.subr.mxu0 0.0
  %445 = vmatpush1.msra.mxu0 %v173
  %446 = vmatprep.subr.mxu0 0.0
  %447 = vmatpush1.msra.mxu0 %v174
  %448 = vmatprep.subr.mxu0 0.0
  %449 = vmatpush1.msra.mxu0 %v175
  %450 = vmatprep.subr.mxu0 0.0
  %451 = vmatpush1.msra.mxu0 %v176
  %452 = vmatprep.subr.mxu0 0.0
  %453 = vmatpush1.msra.mxu0 %v177
  %454 = vmatprep.subr.mxu0 0.0
  %455 = vmatpush1.msra.mxu0 %v178
  %456 = vmatprep.subr.mxu0 0.0
  %457 = vmatpush1.msra.mxu0 %v179
  %458 = vmatprep.subr.mxu0 0.0
  %459 = vmatpush1.msra.mxu0 %v180
  %460 = vmatprep.subr.mxu0 0.0
  %461 = vmatpush1.msra.mxu0 %v181
  %462 = vmatprep.subr.mxu0 0.0
  %463 = vmatpush1.msra.mxu0 %v182
  %464 = vmatprep.mubr.f32.mxu0 %v309
  %465 = vmatmul.mubr.f32.gmra.mrb[0].mxu0 %v307
  %v466 = vpop.f32.mrb[0].mxu0
  %v467 = vadd.f32 %v397, %v466
  %v468 = vpop.f32.mrb[0].mxu0
  %469 = vdwg.mxu0
  %470 = vmatprep.subr.mxu0 0.0
  %471 = vmatpush1.msra.mxu0 %v183
  %472 = vmatprep.subr.mxu0 0.0
  %473 = vmatpush1.msra.mxu0 %v184
  %474 = vmatprep.subr.mxu0 0.0
  %475 = vmatpush1.msra.mxu0 %v185
  %476 = vmatprep.subr.mxu0 0.0
  %477 = vmatpush1.msra.mxu0 %v186
  %478 = vmatprep.subr.mxu0 0.0
  %479 = vmatpush1.msra.mxu0 %v187
  %480 = vmatprep.subr.mxu0 0.0
  %481 = vmatpush1.msra.mxu0 %v188
  %482 = vmatprep.subr.mxu0 0.0
  %483 = vmatpush1.msra.mxu0 %v189
  %484 = vmatprep.subr.mxu0 0.0
  %485 = vmatpush1.msra.mxu0 %v190
  %486 = vmatprep.subr.mxu0 0.0
  %487 = vmatpush1.msra.mxu0 %v191
  %488 = vmatprep.subr.mxu0 0.0
  %489 = vmatpush1.msra.mxu0 %v192
  %490 = vmatprep.subr.mxu0 0.0
  %491 = vmatpush1.msra.mxu0 %v193
  %492 = vmatprep.subr.mxu0 0.0
  %493 = vmatpush1.msra.mxu0 %v194
  %494 = vmatprep.subr.mxu0 0.0
  %495 = vmatpush1.msra.mxu0 %v195
  %496 = vmatprep.subr.mxu0 0.0
  %497 = vmatpush1.msra.mxu0 %v196
  %498 = vmatprep.subr.mxu0 0.0
  %499 = vmatpush1.msra.mxu0 %v197
  %500 = vmatprep.subr.mxu0 0.0
  %501 = vmatpush1.msra.mxu0 %v198
  %502 = vmatprep.subr.mxu0 0.0
  %503 = vmatpush1.msra.mxu0 %v199
  %504 = vmatprep.subr.mxu0 0.0
  %505 = vmatpush1.msra.mxu0 %v200
  %506 = vmatprep.subr.mxu0 0.0
  %507 = vmatpush1.msra.mxu0 %v201
  %508 = vmatprep.subr.mxu0 0.0
  %509 = vmatpush1.msra.mxu0 %v202
  %510 = vmatprep.subr.mxu0 0.0
  %511 = vmatpush1.msra.mxu0 %v203
  %512 = vmatprep.subr.mxu0 0.0
  %513 = vmatpush1.msra.mxu0 %v204
  %514 = vmatprep.subr.mxu0 0.0
  %515 = vmatpush1.msra.mxu0 %v205
  %516 = vmatprep.subr.mxu0 0.0
  %517 = vmatpush1.msra.mxu0 %v206
  %518 = vmatprep.subr.mxu0 0.0
  %519 = vmatpush1.msra.mxu0 %v207
  %520 = vmatprep.subr.mxu0 0.0
  %521 = vmatpush1.msra.mxu0 %v208
  %522 = vmatprep.subr.mxu0 0.0
  %523 = vmatpush1.msra.mxu0 %v328
  %524 = vmatprep.subr.mxu0 0.0
  %525 = vmatpush1.msra.mxu0 0.0
  %526 = vmatprep.subr.mxu0 0.0
  %527 = vmatpush1.msra.mxu0 0.0
  %528 = vmatprep.subr.mxu0 0.0
  %529 = vmatpush1.msra.mxu0 0.0
  %530 = vmatprep.subr.mxu0 0.0
  %531 = vmatpush1.msra.mxu0 0.0
  %532 = vmatprep.subr.mxu0 0.0
  %533 = vmatpush1.msra.mxu0 0.0
  %534 = vmatprep.mubr.f32.mxu0 %v324
  %535 = vmatmul.mubr.f32.gmra.mrb[0].mxu0 %v316
  %v536 = vpop.f32.mrb[0].mxu0
  %v537 = vadd.f32 %v467, %v536
  %v538 = vpop.f32.mrb[0].mxu0
  %539 = vdwg.mxu0
  %v540 = vld [vmem:[%s4] sm:$0x1]
  %v542 = vlaneseq
  %v543 = vshrl.u32 %v542, 7
  %v544 = vsub.s32 0, %v543
  %v545 = vrot.slane %v540, %v544
  %v547 = vadd.f32 %v537, %v545
  %v548 = vmax.f32 %v547, 0.0
  %v549 = vld [vmem:[%s5] sm:$0xff]
  %v550 = vld [vmem:[%s5 + $0x8] sm:$0xff]
  %v551 = vld [vmem:[%s5 + $0x10] sm:$0xff]
  %v552 = vld [vmem:[%s5 + $0x18] sm:$0xff]
  %v553 = vld [vmem:[%s5 + $0x20] sm:$0xff]
  %v554 = vld [vmem:[%s5 + $0x28] sm:$0xff]
  %v555 = vld [vmem:[%s5 + $0x30] sm:$0xff]
  %v556 = vld [vmem:[%s5 + $0x38] sm:$0xff]
  %v557 = vld [vmem:[%s5 + $0x40] sm:$0xff]
  %v558 = vld [vmem:[%s5 + $0x48] sm:$0xff]
  %v559 = vld [vmem:[%s5 + $0x50] sm:$0xff]
  %v560 = vld [vmem:[%s5 + $0x58] sm:$0xff]
  %v561 = vld [vmem:[%s5 + $0x60] sm:$0xff]
  %v562 = vld [vmem:[%s5 + $0x68] sm:$0xff]
  %v563 = vld [vmem:[%s5 + $0x70] sm:$0xff]
  %v564 = vld [vmem:[%s5 + $0x78] sm:$0xff]
  %v565 = vld [vmem:[%s5 + $0x80] sm:$0xff]
  %v566 = vld [vmem:[%s5 + $0x88] sm:$0xff]
  %v567 = vld [vmem:[%s5 + $0x90] sm:$0xff]
  %v568 = vld [vmem:[%s5 + $0x98] sm:$0xff]
  %v569 = vld [vmem:[%s5 + $0xa0] sm:$0xff]
  %v570 = vld [vmem:[%s5 + $0xa8] sm:$0xff]
  %v571 = vld [vmem:[%s5 + $0xb0] sm:$0xff]
  %v572 = vld [vmem:[%s5 + $0xb8] sm:$0xff]
  %v573 = vld [vmem:[%s5 + $0xc0] sm:$0xff]
  %v574 = vld [vmem:[%s5 + $0xc8] sm:$0xff]
  %v575 = vld [vmem:[%s5 + $0xd0] sm:$0xff]
  %v576 = vld [vmem:[%s5 + $0xd8] sm:$0xff]
  %v577 = vld [vmem:[%s5 + $0xe0] sm:$0xff]
  %v578 = vld [vmem:[%s5 + $0xe8] sm:$0xff]
  %v579 = vld [vmem:[%s5 + $0xf0] sm:$0xff]
  %v580 = vld [vmem:[%s5 + $0xf8] sm:$0xff]
  %v581 = vld [vmem:[%s5 + $0x100] sm:$0xff]
  %v582 = vld [vmem:[%s5 + $0x108] sm:$0xff]
  %v583 = vld [vmem:[%s5 + $0x110] sm:$0xff]
  %v584 = vld [vmem:[%s5 + $0x118] sm:$0xff]
  %v585 = vld [vmem:[%s5 + $0x120] sm:$0xff]
  %v586 = vld [vmem:[%s5 + $0x128] sm:$0xff]
  %v587 = vld [vmem:[%s5 + $0x130] sm:$0xff]
  %v588 = vld [vmem:[%s5 + $0x138] sm:$0xff]
  %v589 = vld [vmem:[%s5 + $0x140] sm:$0xff]
  %v590 = vld [vmem:[%s5 + $0x148] sm:$0xff]
  %v591 = vld [vmem:[%s5 + $0x150] sm:$0xff]
  %v592 = vld [vmem:[%s5 + $0x158] sm:$0xff]
  %v593 = vld [vmem:[%s5 + $0x160] sm:$0xff]
  %v594 = vld [vmem:[%s5 + $0x168] sm:$0xff]
  %v595 = vld [vmem:[%s5 + $0x170] sm:$0xff]
  %v596 = vld [vmem:[%s5 + $0x178] sm:$0xff]
  %v597 = vunpack.c.l.bf16 %v549
  %v598 = vunpack.c.h.bf16 %v549
  %v599 = vunpack.c.l.bf16 %v550
  %v600 = vunpack.c.h.bf16 %v550
  %v601 = vunpack.c.l.bf16 %v551
  %v602 = vunpack.c.h.bf16 %v551
  %v603 = vunpack.c.l.bf16 %v552
  %v604 = vunpack.c.h.bf16 %v552
  %v605 = vunpack.c.l.bf16 %v553
  %v606 = vunpack.c.h.bf16 %v553
  %v607 = vunpack.c.l.bf16 %v554
  %v608 = vunpack.c.h.bf16 %v554
  %v609 = vunpack.c.l.bf16 %v555
  %v610 = vunpack.c.h.bf16 %v555
  %v611 = vunpack.c.l.bf16 %v556
  %v612 = vunpack.c.h.bf16 %v556
  %v613 = vunpack.c.l.bf16 %v557
  %v614 = vunpack.c.h.bf16 %v557
  %v615 = vunpack.c.l.bf16 %v558
  %v616 = vunpack.c.h.bf16 %v558
  %v617 = vunpack.c.l.bf16 %v559
  %v618 = vunpack.c.h.bf16 %v559
  %v619 = vunpack.c.l.bf16 %v560
  %v620 = vunpack.c.h.bf16 %v560
  %v621 = vunpack.c.l.bf16 %v561
  %v622 = vunpack.c.h.bf16 %v561
  %v623 = vunpack.c.l.bf16 %v562
  %v624 = vunpack.c.h.bf16 %v562
  %v625 = vunpack.c.l.bf16 %v563
  %v626 = vunpack.c.h.bf16 %v563
  %v627 = vunpack.c.l.bf16 %v564
  %v628 = vunpack.c.h.bf16 %v564
  %v629 = vunpack.c.l.bf16 %v565
  %v630 = vunpack.c.h.bf16 %v565
  %v631 = vunpack.c.l.bf16 %v566
  %v632 = vunpack.c.h.bf16 %v566
  %v633 = vunpack.c.l.bf16 %v567
  %v634 = vunpack.c.h.bf16 %v567
  %v635 = vunpack.c.l.bf16 %v568
  %v636 = vunpack.c.h.bf16 %v568
  %v637 = vunpack.c.l.bf16 %v569
  %v638 = vunpack.c.h.bf16 %v569
  %v639 = vunpack.c.l.bf16 %v570
  %v640 = vunpack.c.h.bf16 %v570
  %v641 = vunpack.c.l.bf16 %v571
  %v642 = vunpack.c.h.bf16 %v571
  %v643 = vunpack.c.l.bf16 %v572
  %v644 = vunpack.c.h.bf16 %v572
  %v645 = vunpack.c.l.bf16 %v573
  %v646 = vunpack.c.h.bf16 %v573
  %v647 = vunpack.c.l.bf16 %v574
  %v648 = vunpack.c.h.bf16 %v574
  %v649 = vunpack.c.l.bf16 %v575
  %v650 = vunpack.c.h.bf16 %v575
  %v651 = vunpack.c.l.bf16 %v576
  %v652 = vunpack.c.h.bf16 %v576
  %v653 = vunpack.c.l.bf16 %v577
  %v654 = vunpack.c.h.bf16 %v577
  %v655 = vunpack.c.l.bf16 %v578
  %v656 = vunpack.c.h.bf16 %v578
  %v657 = vunpack.c.l.bf16 %v579
  %v658 = vunpack.c.h.bf16 %v579
  %v659 = vunpack.c.l.bf16 %v580
  %v660 = vunpack.c.h.bf16 %v580
  %v661 = vunpack.c.l.bf16 %v581
  %v662 = vunpack.c.h.bf16 %v581
  %v663 = vunpack.c.l.bf16 %v582
  %v664 = vunpack.c.h.bf16 %v582
  %v665 = vunpack.c.l.bf16 %v583
  %v666 = vunpack.c.h.bf16 %v583
  %v667 = vunpack.c.l.bf16 %v584
  %v668 = vunpack.c.h.bf16 %v584
  %v669 = vunpack.c.l.bf16 %v585
  %v670 = vunpack.c.h.bf16 %v585
  %v671 = vunpack.c.l.bf16 %v586
  %v672 = vunpack.c.h.bf16 %v586
  %v673 = vunpack.c.l.bf16 %v587
  %v674 = vunpack.c.h.bf16 %v587
  %v675 = vunpack.c.l.bf16 %v588
  %v676 = vunpack.c.h.bf16 %v588
  %v677 = vunpack.c.l.bf16 %v589
  %v678 = vunpack.c.h.bf16 %v589
  %v679 = vunpack.c.l.bf16 %v590
  %v680 = vunpack.c.h.bf16 %v590
  %v681 = vunpack.c.l.bf16 %v591
  %v682 = vunpack.c.h.bf16 %v591
  %v683 = vunpack.c.l.bf16 %v592
  %v684 = vunpack.c.h.bf16 %v592
  %v685 = vunpack.c.l.bf16 %v593
  %v686 = vunpack.c.h.bf16 %v593
  %v687 = vunpack.c.l.bf16 %v594
  %v688 = vunpack.c.h.bf16 %v594
  %v689 = vunpack.c.l.bf16 %v595
  %v690 = vunpack.c.h.bf16 %v595
  %v691 = vunpack.c.l.bf16 %v596
  %v692 = vunpack.c.h.bf16 %v596
  %v693 = vld [vmem:[%s6] sm:$0xff]
  %v694 = vld [vmem:[%s6 + $0x8] sm:$0xf]
  %v697 = vlaneseq
  %v698 = vshrl.u32 %v697, 7
  %v699 = vsub.s32 0, %v698
  %v700 = vrot.slane %v693, %v699
  %v701 = vlaneseq
  %v702 = vshrl.u32 %v701, 7
  %v703 = vsub.s32 1, %v702
  %v704 = vrot.slane %v693, %v703
  %v705 = vlaneseq
  %v706 = vshrl.u32 %v705, 7
  %v707 = vsub.s32 2, %v706
  %v708 = vrot.slane %v693, %v707
  %v709 = vlaneseq
  %v710 = vshrl.u32 %v709, 7
  %v711 = vsub.s32 3, %v710
  %v712 = vrot.slane %v693, %v711
  %v713 = vlaneseq
  %v714 = vshrl.u32 %v713, 7
  %v715 = vsub.s32 4, %v714
  %v716 = vrot.slane %v693, %v715
  %v717 = vlaneseq
  %v718 = vshrl.u32 %v717, 7
  %v719 = vsub.s32 5, %v718
  %v720 = vrot.slane %v693, %v719
  %v721 = vlaneseq
  %v722 = vshrl.u32 %v721, 7
  %v723 = vsub.s32 6, %v722
  %v724 = vrot.slane %v693, %v723
  %v725 = vlaneseq
  %v726 = vshrl.u32 %v725, 7
  %v727 = vsub.s32 7, %v726
  %v728 = vrot.slane %v693, %v727
  %v729 = vlaneseq
  %v730 = vshrl.u32 %v729, 7
  %v731 = vsub.s32 0, %v730
  %v732 = vrot.slane %v694, %v731
  %v733 = vlaneseq
  %v734 = vshrl.u32 %v733, 7
  %v735 = vsub.s32 1, %v734
  %v736 = vrot.slane %v694, %v735
  %v737 = vlaneseq
  %v738 = vshrl.u32 %v737, 7
  %v739 = vsub.s32 2, %v738
  %v740 = vrot.slane %v694, %v739
  %v741 = vlaneseq
  %v742 = vshrl.u32 %v741, 7
  %v743 = vsub.s32 3, %v742
  %v744 = vrot.slane %v694, %v743
  %vm757 = vcmask 523264
  %v759 = vsel %vm757, %v548, 0
  %761 = vmatprep.subr.mxu0 %v598
  %762 = vmatpush1.msra.mxu0 %v597
  %763 = vmatprep.subr.mxu0 %v610
  %764 = vmatpush1.msra.mxu0 %v609
  %765 = vmatprep.subr.mxu0 %v622
  %766 = vmatpush1.msra.mxu0 %v621
  %767 = vmatprep.subr.mxu0 %v634
  %768 = vmatpush1.msra.mxu0 %v633
  %769 = vmatprep.subr.mxu0 %v646
  %770 = vmatpush1.msra.mxu0 %v645
  %771 = vmatprep.subr.mxu0 %v658
  %772 = vmatpush1.msra.mxu0 %v657
  %773 = vmatprep.subr.mxu0 %v670
  %774 = vmatpush1.msra.mxu0 %v669
  %775 = vmatprep.subr.mxu0 %v682
  %776 = vmatpush1.msra.mxu0 %v681
  %777 = vmatprep.subr.mxu0 0.0
  %778 = vmatpush1.msra.mxu0 0.0
  %779 = vmatprep.subr.mxu0 0.0
  %780 = vmatpush1.msra.mxu0 0.0
  %781 = vmatprep.subr.mxu0 0.0
  %782 = vmatpush1.msra.mxu0 0.0
  %783 = vmatprep.subr.mxu0 0.0
  %784 = vmatpush1.msra.mxu0 0.0
  %785 = vmatprep.subr.mxu0 0.0
  %786 = vmatpush1.msra.mxu0 0.0
  %787 = vmatprep.subr.mxu0 0.0
  %788 = vmatpush1.msra.mxu0 0.0
  %789 = vmatprep.subr.mxu0 0.0
  %790 = vmatpush1.msra.mxu0 0.0
  %791 = vmatprep.subr.mxu0 0.0
  %792 = vmatpush1.msra.mxu0 0.0
  %793 = vmatprep.subr.mxu0 0.0
  %794 = vmatpush1.msra.mxu0 0.0
  %795 = vmatprep.subr.mxu0 0.0
  %796 = vmatpush1.msra.mxu0 0.0
  %797 = vmatprep.subr.mxu0 0.0
  %798 = vmatpush1.msra.mxu0 0.0
  %799 = vmatprep.subr.mxu0 0.0
  %800 = vmatpush1.msra.mxu0 0.0
  %801 = vmatprep.subr.mxu0 0.0
  %802 = vmatpush1.msra.mxu0 0.0
  %803 = vmatprep.subr.mxu0 0.0
  %804 = vmatpush1.msra.mxu0 0.0
  %805 = vmatprep.subr.mxu0 0.0
  %806 = vmatpush1.msra.mxu0 0.0
  %807 = vmatprep.subr.mxu0 0.0
  %808 = vmatpush1.msra.mxu0 0.0
  %809 = vmatprep.subr.mxu0 0.0
  %810 = vmatpush1.msra.mxu0 0.0
  %811 = vmatprep.subr.mxu0 0.0
  %812 = vmatpush1.msra.mxu0 0.0
  %813 = vmatprep.subr.mxu0 0.0
  %814 = vmatpush1.msra.mxu0 0.0
  %815 = vmatprep.subr.mxu0 0.0
  %816 = vmatpush1.msra.mxu0 0.0
  %817 = vmatprep.subr.mxu0 0.0
  %818 = vmatpush1.msra.mxu0 0.0
  %819 = vmatprep.subr.mxu0 0.0
  %820 = vmatpush1.msra.mxu0 0.0
  %821 = vmatprep.subr.mxu0 0.0
  %822 = vmatpush1.msra.mxu0 0.0
  %823 = vmatprep.subr.mxu0 0.0
  %824 = vmatpush1.msra.mxu0 0.0
  %825 = vmatprep.mubr.f32.mxu0 0.0
  %826 = vmatmul.mubr.f32.gmra.mrb[0].mxu0 %v759
  %v827 = vpop.f32.mrb[0].mxu0
  %v828 = vadd.f32 %v700, %v827
  %v829 = vpop.f32.mrb[0].mxu0
  %v830 = vadd.f32 %v704, %v829
  %831 = vdwg.mxu0
  %832 = vmatprep.subr.mxu0 %v600
  %833 = vmatpush1.msra.mxu0 %v599
  %834 = vmatprep.subr.mxu0 %v612
  %835 = vmatpush1.msra.mxu0 %v611
  %836 = vmatprep.subr.mxu0 %v624
  %837 = vmatpush1.msra.mxu0 %v623
  %838 = vmatprep.subr.mxu0 %v636
  %839 = vmatpush1.msra.mxu0 %v635
  %840 = vmatprep.subr.mxu0 %v648
  %841 = vmatpush1.msra.mxu0 %v647
  %842 = vmatprep.subr.mxu0 %v660
  %843 = vmatpush1.msra.mxu0 %v659
  %844 = vmatprep.subr.mxu0 %v672
  %845 = vmatpush1.msra.mxu0 %v671
  %846 = vmatprep.subr.mxu0 %v684
  %847 = vmatpush1.msra.mxu0 %v683
  %848 = vmatprep.subr.mxu0 0.0
  %849 = vmatpush1.msra.mxu0 0.0
  %850 = vmatprep.subr.mxu0 0.0
  %851 = vmatpush1.msra.mxu0 0.0
  %852 = vmatprep.subr.mxu0 0.0
  %853 = vmatpush1.msra.mxu0 0.0
  %854 = vmatprep.subr.mxu0 0.0
  %855 = vmatpush1.msra.mxu0 0.0
  %856 = vmatprep.subr.mxu0 0.0
  %857 = vmatpush1.msra.mxu0 0.0
  %858 = vmatprep.subr.mxu0 0.0
  %859 = vmatpush1.msra.mxu0 0.0
  %860 = vmatprep.subr.mxu0 0.0
  %861 = vmatpush1.msra.mxu0 0.0
  %862 = vmatprep.subr.mxu0 0.0
  %863 = vmatpush1.msra.mxu0 0.0
  %864 = vmatprep.subr.mxu0 0.0
  %865 = vmatpush1.msra.mxu0 0.0
  %866 = vmatprep.subr.mxu0 0.0
  %867 = vmatpush1.msra.mxu0 0.0
  %868 = vmatprep.subr.mxu0 0.0
  %869 = vmatpush1.msra.mxu0 0.0
  %870 = vmatprep.subr.mxu0 0.0
  %871 = vmatpush1.msra.mxu0 0.0
  %872 = vmatprep.subr.mxu0 0.0
  %873 = vmatpush1.msra.mxu0 0.0
  %874 = vmatprep.subr.mxu0 0.0
  %875 = vmatpush1.msra.mxu0 0.0
  %876 = vmatprep.subr.mxu0 0.0
  %877 = vmatpush1.msra.mxu0 0.0
  %878 = vmatprep.subr.mxu0 0.0
  %879 = vmatpush1.msra.mxu0 0.0
  %880 = vmatprep.subr.mxu0 0.0
  %881 = vmatpush1.msra.mxu0 0.0
  %882 = vmatprep.subr.mxu0 0.0
  %883 = vmatpush1.msra.mxu0 0.0
  %884 = vmatprep.subr.mxu0 0.0
  %885 = vmatpush1.msra.mxu0 0.0
  %886 = vmatprep.subr.mxu0 0.0
  %887 = vmatpush1.msra.mxu0 0.0
  %888 = vmatprep.subr.mxu0 0.0
  %889 = vmatpush1.msra.mxu0 0.0
  %890 = vmatprep.subr.mxu0 0.0
  %891 = vmatpush1.msra.mxu0 0.0
  %892 = vmatprep.subr.mxu0 0.0
  %893 = vmatpush1.msra.mxu0 0.0
  %894 = vmatprep.subr.mxu0 0.0
  %895 = vmatpush1.msra.mxu0 0.0
  %896 = vmatprep.mubr.f32.mxu0 0.0
  %897 = vmatmul.mubr.f32.gmra.mrb[0].mxu0 %v759
  %v898 = vpop.f32.mrb[0].mxu0
  %v899 = vadd.f32 %v708, %v898
  %v900 = vpop.f32.mrb[0].mxu0
  %v901 = vadd.f32 %v712, %v900
  %902 = vdwg.mxu0
  %903 = vmatprep.subr.mxu0 %v602
  %904 = vmatpush1.msra.mxu0 %v601
  %905 = vmatprep.subr.mxu0 %v614
  %906 = vmatpush1.msra.mxu0 %v613
  %907 = vmatprep.subr.mxu0 %v626
  %908 = vmatpush1.msra.mxu0 %v625
  %909 = vmatprep.subr.mxu0 %v638
  %910 = vmatpush1.msra.mxu0 %v637
  %911 = vmatprep.subr.mxu0 %v650
  %912 = vmatpush1.msra.mxu0 %v649
  %913 = vmatprep.subr.mxu0 %v662
  %914 = vmatpush1.msra.mxu0 %v661
  %915 = vmatprep.subr.mxu0 %v674
  %916 = vmatpush1.msra.mxu0 %v673
  %917 = vmatprep.subr.mxu0 %v686
  %918 = vmatpush1.msra.mxu0 %v685
  %919 = vmatprep.subr.mxu0 0.0
  %920 = vmatpush1.msra.mxu0 0.0
  %921 = vmatprep.subr.mxu0 0.0
  %922 = vmatpush1.msra.mxu0 0.0
  %923 = vmatprep.subr.mxu0 0.0
  %924 = vmatpush1.msra.mxu0 0.0
  %925 = vmatprep.subr.mxu0 0.0
  %926 = vmatpush1.msra.mxu0 0.0
  %927 = vmatprep.subr.mxu0 0.0
  %928 = vmatpush1.msra.mxu0 0.0
  %929 = vmatprep.subr.mxu0 0.0
  %930 = vmatpush1.msra.mxu0 0.0
  %931 = vmatprep.subr.mxu0 0.0
  %932 = vmatpush1.msra.mxu0 0.0
  %933 = vmatprep.subr.mxu0 0.0
  %934 = vmatpush1.msra.mxu0 0.0
  %935 = vmatprep.subr.mxu0 0.0
  %936 = vmatpush1.msra.mxu0 0.0
  %937 = vmatprep.subr.mxu0 0.0
  %938 = vmatpush1.msra.mxu0 0.0
  %939 = vmatprep.subr.mxu0 0.0
  %940 = vmatpush1.msra.mxu0 0.0
  %941 = vmatprep.subr.mxu0 0.0
  %942 = vmatpush1.msra.mxu0 0.0
  %943 = vmatprep.subr.mxu0 0.0
  %944 = vmatpush1.msra.mxu0 0.0
  %945 = vmatprep.subr.mxu0 0.0
  %946 = vmatpush1.msra.mxu0 0.0
  %947 = vmatprep.subr.mxu0 0.0
  %948 = vmatpush1.msra.mxu0 0.0
  %949 = vmatprep.subr.mxu0 0.0
  %950 = vmatpush1.msra.mxu0 0.0
  %951 = vmatprep.subr.mxu0 0.0
  %952 = vmatpush1.msra.mxu0 0.0
  %953 = vmatprep.subr.mxu0 0.0
  %954 = vmatpush1.msra.mxu0 0.0
  %955 = vmatprep.subr.mxu0 0.0
  %956 = vmatpush1.msra.mxu0 0.0
  %957 = vmatprep.subr.mxu0 0.0
  %958 = vmatpush1.msra.mxu0 0.0
  %959 = vmatprep.subr.mxu0 0.0
  %960 = vmatpush1.msra.mxu0 0.0
  %961 = vmatprep.subr.mxu0 0.0
  %962 = vmatpush1.msra.mxu0 0.0
  %963 = vmatprep.subr.mxu0 0.0
  %964 = vmatpush1.msra.mxu0 0.0
  %965 = vmatprep.subr.mxu0 0.0
  %966 = vmatpush1.msra.mxu0 0.0
  %967 = vmatprep.mubr.f32.mxu0 0.0
  %968 = vmatmul.mubr.f32.gmra.mrb[0].mxu0 %v759
  %v969 = vpop.f32.mrb[0].mxu0
  %v970 = vadd.f32 %v716, %v969
  %v971 = vpop.f32.mrb[0].mxu0
  %v972 = vadd.f32 %v720, %v971
  %973 = vdwg.mxu0
  %974 = vmatprep.subr.mxu0 %v604
  %975 = vmatpush1.msra.mxu0 %v603
  %976 = vmatprep.subr.mxu0 %v616
  %977 = vmatpush1.msra.mxu0 %v615
  %978 = vmatprep.subr.mxu0 %v628
  %979 = vmatpush1.msra.mxu0 %v627
  %980 = vmatprep.subr.mxu0 %v640
  %981 = vmatpush1.msra.mxu0 %v639
  %982 = vmatprep.subr.mxu0 %v652
  %983 = vmatpush1.msra.mxu0 %v651
  %984 = vmatprep.subr.mxu0 %v664
  %985 = vmatpush1.msra.mxu0 %v663
  %986 = vmatprep.subr.mxu0 %v676
  %987 = vmatpush1.msra.mxu0 %v675
  %988 = vmatprep.subr.mxu0 %v688
  %989 = vmatpush1.msra.mxu0 %v687
  %990 = vmatprep.subr.mxu0 0.0
  %991 = vmatpush1.msra.mxu0 0.0
  %992 = vmatprep.subr.mxu0 0.0
  %993 = vmatpush1.msra.mxu0 0.0
  %994 = vmatprep.subr.mxu0 0.0
  %995 = vmatpush1.msra.mxu0 0.0
  %996 = vmatprep.subr.mxu0 0.0
  %997 = vmatpush1.msra.mxu0 0.0
  %998 = vmatprep.subr.mxu0 0.0
  %999 = vmatpush1.msra.mxu0 0.0
  %1000 = vmatprep.subr.mxu0 0.0
  %1001 = vmatpush1.msra.mxu0 0.0
  %1002 = vmatprep.subr.mxu0 0.0
  %1003 = vmatpush1.msra.mxu0 0.0
  %1004 = vmatprep.subr.mxu0 0.0
  %1005 = vmatpush1.msra.mxu0 0.0
  %1006 = vmatprep.subr.mxu0 0.0
  %1007 = vmatpush1.msra.mxu0 0.0
  %1008 = vmatprep.subr.mxu0 0.0
  %1009 = vmatpush1.msra.mxu0 0.0
  %1010 = vmatprep.subr.mxu0 0.0
  %1011 = vmatpush1.msra.mxu0 0.0
  %1012 = vmatprep.subr.mxu0 0.0
  %1013 = vmatpush1.msra.mxu0 0.0
  %1014 = vmatprep.subr.mxu0 0.0
  %1015 = vmatpush1.msra.mxu0 0.0
  %1016 = vmatprep.subr.mxu0 0.0
  %1017 = vmatpush1.msra.mxu0 0.0
  %1018 = vmatprep.subr.mxu0 0.0
  %1019 = vmatpush1.msra.mxu0 0.0
  %1020 = vmatprep.subr.mxu0 0.0
  %1021 = vmatpush1.msra.mxu0 0.0
  %1022 = vmatprep.subr.mxu0 0.0
  %1023 = vmatpush1.msra.mxu0 0.0
  %1024 = vmatprep.subr.mxu0 0.0
  %1025 = vmatpush1.msra.mxu0 0.0
  %1026 = vmatprep.subr.mxu0 0.0
  %1027 = vmatpush1.msra.mxu0 0.0
  %1028 = vmatprep.subr.mxu0 0.0
  %1029 = vmatpush1.msra.mxu0 0.0
  %1030 = vmatprep.subr.mxu0 0.0
  %1031 = vmatpush1.msra.mxu0 0.0
  %1032 = vmatprep.subr.mxu0 0.0
  %1033 = vmatpush1.msra.mxu0 0.0
  %1034 = vmatprep.subr.mxu0 0.0
  %1035 = vmatpush1.msra.mxu0 0.0
  %1036 = vmatprep.subr.mxu0 0.0
  %1037 = vmatpush1.msra.mxu0 0.0
  %1038 = vmatprep.mubr.f32.mxu0 0.0
  %1039 = vmatmul.mubr.f32.gmra.mrb[0].mxu0 %v759
  %v1040 = vpop.f32.mrb[0].mxu0
  %v1041 = vadd.f32 %v724, %v1040
  %v1042 = vpop.f32.mrb[0].mxu0
  %v1043 = vadd.f32 %v728, %v1042
  %1044 = vdwg.mxu0
  %1045 = vmatprep.subr.mxu0 %v606
  %1046 = vmatpush1.msra.mxu0 %v605
  %1047 = vmatprep.subr.mxu0 %v618
  %1048 = vmatpush1.msra.mxu0 %v617
  %1049 = vmatprep.subr.mxu0 %v630
  %1050 = vmatpush1.msra.mxu0 %v629
  %1051 = vmatprep.subr.mxu0 %v642
  %1052 = vmatpush1.msra.mxu0 %v641
  %1053 = vmatprep.subr.mxu0 %v654
  %1054 = vmatpush1.msra.mxu0 %v653
  %1055 = vmatprep.subr.mxu0 %v666
  %1056 = vmatpush1.msra.mxu0 %v665
  %1057 = vmatprep.subr.mxu0 %v678
  %1058 = vmatpush1.msra.mxu0 %v677
  %1059 = vmatprep.subr.mxu0 %v690
  %1060 = vmatpush1.msra.mxu0 %v689
  %1061 = vmatprep.subr.mxu0 0.0
  %1062 = vmatpush1.msra.mxu0 0.0
  %1063 = vmatprep.subr.mxu0 0.0
  %1064 = vmatpush1.msra.mxu0 0.0
  %1065 = vmatprep.subr.mxu0 0.0
  %1066 = vmatpush1.msra.mxu0 0.0
  %1067 = vmatprep.subr.mxu0 0.0
  %1068 = vmatpush1.msra.mxu0 0.0
  %1069 = vmatprep.subr.mxu0 0.0
  %1070 = vmatpush1.msra.mxu0 0.0
  %1071 = vmatprep.subr.mxu0 0.0
  %1072 = vmatpush1.msra.mxu0 0.0
  %1073 = vmatprep.subr.mxu0 0.0
  %1074 = vmatpush1.msra.mxu0 0.0
  %1075 = vmatprep.subr.mxu0 0.0
  %1076 = vmatpush1.msra.mxu0 0.0
  %1077 = vmatprep.subr.mxu0 0.0
  %1078 = vmatpush1.msra.mxu0 0.0
  %1079 = vmatprep.subr.mxu0 0.0
  %1080 = vmatpush1.msra.mxu0 0.0
  %1081 = vmatprep.subr.mxu0 0.0
  %1082 = vmatpush1.msra.mxu0 0.0
  %1083 = vmatprep.subr.mxu0 0.0
  %1084 = vmatpush1.msra.mxu0 0.0
  %1085 = vmatprep.subr.mxu0 0.0
  %1086 = vmatpush1.msra.mxu0 0.0
  %1087 = vmatprep.subr.mxu0 0.0
  %1088 = vmatpush1.msra.mxu0 0.0
  %1089 = vmatprep.subr.mxu0 0.0
  %1090 = vmatpush1.msra.mxu0 0.0
  %1091 = vmatprep.subr.mxu0 0.0
  %1092 = vmatpush1.msra.mxu0 0.0
  %1093 = vmatprep.subr.mxu0 0.0
  %1094 = vmatpush1.msra.mxu0 0.0
  %1095 = vmatprep.subr.mxu0 0.0
  %1096 = vmatpush1.msra.mxu0 0.0
  %1097 = vmatprep.subr.mxu0 0.0
  %1098 = vmatpush1.msra.mxu0 0.0
  %1099 = vmatprep.subr.mxu0 0.0
  %1100 = vmatpush1.msra.mxu0 0.0
  %1101 = vmatprep.subr.mxu0 0.0
  %1102 = vmatpush1.msra.mxu0 0.0
  %1103 = vmatprep.subr.mxu0 0.0
  %1104 = vmatpush1.msra.mxu0 0.0
  %1105 = vmatprep.subr.mxu0 0.0
  %1106 = vmatpush1.msra.mxu0 0.0
  %1107 = vmatprep.subr.mxu0 0.0
  %1108 = vmatpush1.msra.mxu0 0.0
  %1109 = vmatprep.mubr.f32.mxu0 0.0
  %1110 = vmatmul.mubr.f32.gmra.mrb[0].mxu0 %v759
  %v1111 = vpop.f32.mrb[0].mxu0
  %v1112 = vadd.f32 %v732, %v1111
  %v1113 = vpop.f32.mrb[0].mxu0
  %v1114 = vadd.f32 %v736, %v1113
  %1115 = vdwg.mxu0
  %1116 = vmatprep.subr.mxu0 %v608
  %1117 = vmatpush1.msra.mxu0 %v607
  %1118 = vmatprep.subr.mxu0 %v620
  %1119 = vmatpush1.msra.mxu0 %v619
  %1120 = vmatprep.subr.mxu0 %v632
  %1121 = vmatpush1.msra.mxu0 %v631
  %1122 = vmatprep.subr.mxu0 %v644
  %1123 = vmatpush1.msra.mxu0 %v643
  %1124 = vmatprep.subr.mxu0 %v656
  %1125 = vmatpush1.msra.mxu0 %v655
  %1126 = vmatprep.subr.mxu0 %v668
  %1127 = vmatpush1.msra.mxu0 %v667
  %1128 = vmatprep.subr.mxu0 %v680
  %1129 = vmatpush1.msra.mxu0 %v679
  %1130 = vmatprep.subr.mxu0 %v692
  %1131 = vmatpush1.msra.mxu0 %v691
  %1132 = vmatprep.subr.mxu0 0.0
  %1133 = vmatpush1.msra.mxu0 0.0
  %1134 = vmatprep.subr.mxu0 0.0
  %1135 = vmatpush1.msra.mxu0 0.0
  %1136 = vmatprep.subr.mxu0 0.0
  %1137 = vmatpush1.msra.mxu0 0.0
  %1138 = vmatprep.subr.mxu0 0.0
  %1139 = vmatpush1.msra.mxu0 0.0
  %1140 = vmatprep.subr.mxu0 0.0
  %1141 = vmatpush1.msra.mxu0 0.0
  %1142 = vmatprep.subr.mxu0 0.0
  %1143 = vmatpush1.msra.mxu0 0.0
  %1144 = vmatprep.subr.mxu0 0.0
  %1145 = vmatpush1.msra.mxu0 0.0
  %1146 = vmatprep.subr.mxu0 0.0
  %1147 = vmatpush1.msra.mxu0 0.0
  %1148 = vmatprep.subr.mxu0 0.0
  %1149 = vmatpush1.msra.mxu0 0.0
  %1150 = vmatprep.subr.mxu0 0.0
  %1151 = vmatpush1.msra.mxu0 0.0
  %1152 = vmatprep.subr.mxu0 0.0
  %1153 = vmatpush1.msra.mxu0 0.0
  %1154 = vmatprep.subr.mxu0 0.0
  %1155 = vmatpush1.msra.mxu0 0.0
  %1156 = vmatprep.subr.mxu0 0.0
  %1157 = vmatpush1.msra.mxu0 0.0
  %1158 = vmatprep.subr.mxu0 0.0
  %1159 = vmatpush1.msra.mxu0 0.0
  %1160 = vmatprep.subr.mxu0 0.0
  %1161 = vmatpush1.msra.mxu0 0.0
  %1162 = vmatprep.subr.mxu0 0.0
  %1163 = vmatpush1.msra.mxu0 0.0
  %1164 = vmatprep.subr.mxu0 0.0
  %1165 = vmatpush1.msra.mxu0 0.0
  %1166 = vmatprep.subr.mxu0 0.0
  %1167 = vmatpush1.msra.mxu0 0.0
  %1168 = vmatprep.subr.mxu0 0.0
  %1169 = vmatpush1.msra.mxu0 0.0
  %1170 = vmatprep.subr.mxu0 0.0
  %1171 = vmatpush1.msra.mxu0 0.0
  %1172 = vmatprep.subr.mxu0 0.0
  %1173 = vmatpush1.msra.mxu0 0.0
  %1174 = vmatprep.subr.mxu0 0.0
  %1175 = vmatpush1.msra.mxu0 0.0
  %1176 = vmatprep.subr.mxu0 0.0
  %1177 = vmatpush1.msra.mxu0 0.0
  %1178 = vmatprep.subr.mxu0 0.0
  %1179 = vmatpush1.msra.mxu0 0.0
  %1180 = vmatprep.mubr.f32.mxu0 0.0
  %1181 = vmatmul.mubr.f32.gmra.mrb[0].mxu0 %v759
  %v1182 = vpop.f32.mrb[0].mxu0
  %v1183 = vadd.f32 %v740, %v1182
  %v1184 = vpop.f32.mrb[0].mxu0
  %v1185 = vadd.f32 %v744, %v1184
  %1186 = vdwg.mxu0
  %v1187 = vlaneseq
  %v1188 = vand.u32 %v1187, 127
  %v1189 = vadd.s32 %v1188, 128
  %v1190 = vadd.s32 %v1188, 256
  %v1191 = vadd.s32 %v1188, 384
  %v1192 = vadd.s32 %v1188, 512
  %v1193 = vadd.s32 %v1188, 640
  %v1194 = vadd.s32 %v1188, 768
  %v1195 = vadd.s32 %v1188, 896
  %v1196 = vadd.s32 %v1188, 1024
  %v1197 = vadd.s32 %v1188, 1152
  %v1198 = vadd.s32 %v1188, 1280
  %v1199 = vadd.s32 %v1188, 1408
  %vm1200 = vcmp.ge.s32.totalorder %v1188, 0
  %vm1201 = vcmp.ge.s32.totalorder %v1189, 0
  %vm1202 = vcmp.ge.s32.totalorder %v1190, 0
  %vm1203 = vcmp.ge.s32.totalorder %v1191, 0
  %vm1204 = vcmp.ge.s32.totalorder %v1192, 0
  %vm1205 = vcmp.ge.s32.totalorder %v1193, 0
  %vm1206 = vcmp.ge.s32.totalorder %v1194, 0
  %vm1207 = vcmp.ge.s32.totalorder %v1195, 0
  %vm1208 = vcmp.ge.s32.totalorder %v1196, 0
  %vm1209 = vcmp.ge.s32.totalorder %v1197, 0
  %vm1210 = vcmp.ge.s32.totalorder %v1198, 0
  %vm1211 = vcmp.ge.s32.totalorder %v1199, 0
  %vm1212 = vcmp.lt.s32.totalorder %v1188, 720
  %vm1213 = vcmp.lt.s32.totalorder %v1189, 720
  %vm1214 = vcmp.lt.s32.totalorder %v1190, 720
  %vm1215 = vcmp.lt.s32.totalorder %v1191, 720
  %vm1216 = vcmp.lt.s32.totalorder %v1192, 720
  %vm1217 = vcmp.lt.s32.totalorder %v1193, 720
  %vm1218 = vcmp.lt.s32.totalorder %v1194, 720
  %vm1219 = vcmp.lt.s32.totalorder %v1195, 720
  %vm1220 = vcmp.lt.s32.totalorder %v1196, 720
  %vm1221 = vcmp.lt.s32.totalorder %v1197, 720
  %vm1222 = vcmp.lt.s32.totalorder %v1198, 720
  %vm1223 = vcmp.lt.s32.totalorder %v1199, 720
  %vm1224 = vmand %vm1200, %vm1212
  %vm1225 = vmand %vm1201, %vm1213
  %vm1226 = vmand %vm1202, %vm1214
  %vm1227 = vmand %vm1203, %vm1215
  %vm1228 = vmand %vm1204, %vm1216
  %vm1229 = vmand %vm1205, %vm1217
  %vm1230 = vmand %vm1206, %vm1218
  %vm1231 = vmand %vm1207, %vm1219
  %vm1232 = vmand %vm1208, %vm1220
  %vm1233 = vmand %vm1209, %vm1221
  %vm1234 = vmand %vm1210, %vm1222
  %vm1235 = vmand %vm1211, %vm1223
  %vm1236 = vcmp.ge.s32.totalorder %v1188, 724
  %vm1237 = vcmp.ge.s32.totalorder %v1189, 724
  %vm1238 = vcmp.ge.s32.totalorder %v1190, 724
  %vm1239 = vcmp.ge.s32.totalorder %v1191, 724
  %vm1240 = vcmp.ge.s32.totalorder %v1192, 724
  %vm1241 = vcmp.ge.s32.totalorder %v1193, 724
  %vm1242 = vcmp.ge.s32.totalorder %v1194, 724
  %vm1243 = vcmp.ge.s32.totalorder %v1195, 724
  %vm1244 = vcmp.ge.s32.totalorder %v1196, 724
  %vm1245 = vcmp.ge.s32.totalorder %v1197, 724
  %vm1246 = vcmp.ge.s32.totalorder %v1198, 724
  %vm1247 = vcmp.ge.s32.totalorder %v1199, 724
  %vm1248 = vcmp.lt.s32.totalorder %v1188, 1444
  %vm1249 = vcmp.lt.s32.totalorder %v1189, 1444
  %vm1250 = vcmp.lt.s32.totalorder %v1190, 1444
  %vm1251 = vcmp.lt.s32.totalorder %v1191, 1444
  %vm1252 = vcmp.lt.s32.totalorder %v1192, 1444
  %vm1253 = vcmp.lt.s32.totalorder %v1193, 1444
  %vm1254 = vcmp.lt.s32.totalorder %v1194, 1444
  %vm1255 = vcmp.lt.s32.totalorder %v1195, 1444
  %vm1256 = vcmp.lt.s32.totalorder %v1196, 1444
  %vm1257 = vcmp.lt.s32.totalorder %v1197, 1444
  %vm1258 = vcmp.lt.s32.totalorder %v1198, 1444
  %vm1259 = vcmp.lt.s32.totalorder %v1199, 1444
  %vm1260 = vmand %vm1236, %vm1248
  %vm1261 = vmand %vm1237, %vm1249
  %vm1262 = vmand %vm1238, %vm1250
  %vm1263 = vmand %vm1239, %vm1251
  %vm1264 = vmand %vm1240, %vm1252
  %vm1265 = vmand %vm1241, %vm1253
  %vm1266 = vmand %vm1242, %vm1254
  %vm1267 = vmand %vm1243, %vm1255
  %vm1268 = vmand %vm1244, %vm1256
  %vm1269 = vmand %vm1245, %vm1257
  %vm1270 = vmand %vm1246, %vm1258
  %vm1271 = vmand %vm1247, %vm1259
  %vm1272 = vmor %vm1224, %vm1260
  %vm1273 = vmor %vm1225, %vm1261
  %vm1274 = vmor %vm1226, %vm1262
  %vm1275 = vmor %vm1227, %vm1263
  %vm1276 = vmor %vm1228, %vm1264
  %vm1277 = vmor %vm1229, %vm1265
  %vm1278 = vmor %vm1230, %vm1266
  %vm1279 = vmor %vm1231, %vm1267
  %vm1280 = vmor %vm1232, %vm1268
  %vm1281 = vmor %vm1233, %vm1269
  %vm1282 = vmor %vm1234, %vm1270
  %vm1283 = vmor %vm1235, %vm1271
  %vm1284 = vcmp.eq.s32.totalorder %v1188, 1449
  %vm1285 = vcmp.eq.s32.totalorder %v1189, 1449
  %vm1286 = vcmp.eq.s32.totalorder %v1190, 1449
  %vm1287 = vcmp.eq.s32.totalorder %v1191, 1449
  %vm1288 = vcmp.eq.s32.totalorder %v1192, 1449
  %vm1289 = vcmp.eq.s32.totalorder %v1193, 1449
  %vm1290 = vcmp.eq.s32.totalorder %v1194, 1449
  %vm1291 = vcmp.eq.s32.totalorder %v1195, 1449
  %vm1292 = vcmp.eq.s32.totalorder %v1196, 1449
  %vm1293 = vcmp.eq.s32.totalorder %v1197, 1449
  %vm1294 = vcmp.eq.s32.totalorder %v1198, 1449
  %vm1295 = vcmp.eq.s32.totalorder %v1199, 1449
  %v1296 = vtanh.pop %v828
  %v1297 = vtanh.pop %v830
  %v1298 = vtanh.pop %v899
  %v1299 = vtanh.pop %v901
  %v1300 = vtanh.pop %v970
  %v1301 = vtanh.pop %v972
  %v1302 = vtanh.pop %v1041
  %v1303 = vtanh.pop %v1043
  %v1304 = vtanh.pop %v1112
  %v1305 = vtanh.pop %v1114
  %v1306 = vtanh.pop %v1183
  %v1307 = vtanh.pop %v1185
  %v1308 = vmul.f32 %v1296, 0.5
  %v1309 = vmul.f32 %v1297, 0.5
  %v1310 = vmul.f32 %v1298, 0.5
  %v1311 = vmul.f32 %v1299, 0.5
  %v1312 = vmul.f32 %v1300, 0.5
  %v1313 = vmul.f32 %v1301, 0.5
  %v1314 = vmul.f32 %v1302, 0.5
  %v1315 = vmul.f32 %v1303, 0.5
  %v1316 = vmul.f32 %v1304, 0.5
  %v1317 = vmul.f32 %v1305, 0.5
  %v1318 = vmul.f32 %v1306, 0.5
  %v1319 = vmul.f32 %v1307, 0.5
  %v1320 = vadd.f32 %v1308, 0.5
  %v1321 = vadd.f32 %v1309, 0.5
  %v1322 = vadd.f32 %v1310, 0.5
  %v1323 = vadd.f32 %v1311, 0.5
  %v1324 = vadd.f32 %v1312, 0.5
  %v1325 = vadd.f32 %v1313, 0.5
  %v1326 = vadd.f32 %v1314, 0.5
  %v1327 = vadd.f32 %v1315, 0.5
  %v1328 = vadd.f32 %v1316, 0.5
  %v1329 = vadd.f32 %v1317, 0.5
  %v1330 = vadd.f32 %v1318, 0.5
  %v1331 = vadd.f32 %v1319, 0.5
  %v1332 = vsel %vm1272, %v1296, %v828
  %v1333 = vsel %vm1273, %v1297, %v830
  %v1334 = vsel %vm1274, %v1298, %v899
  %v1335 = vsel %vm1275, %v1299, %v901
  %v1336 = vsel %vm1276, %v1300, %v970
  %v1337 = vsel %vm1277, %v1301, %v972
  %v1338 = vsel %vm1278, %v1302, %v1041
  %v1339 = vsel %vm1279, %v1303, %v1043
  %v1340 = vsel %vm1280, %v1304, %v1112
  %v1341 = vsel %vm1281, %v1305, %v1114
  %v1342 = vsel %vm1282, %v1306, %v1183
  %v1343 = vsel %vm1283, %v1307, %v1185
  %v1344 = vsel %vm1284, %v1320, %v1332
  %v1345 = vsel %vm1285, %v1321, %v1333
  %v1346 = vsel %vm1286, %v1322, %v1334
  %v1347 = vsel %vm1287, %v1323, %v1335
  %v1348 = vsel %vm1288, %v1324, %v1336
  %v1349 = vsel %vm1289, %v1325, %v1337
  %v1350 = vsel %vm1290, %v1326, %v1338
  %v1351 = vsel %vm1291, %v1327, %v1339
  %v1352 = vsel %vm1292, %v1328, %v1340
  %v1353 = vsel %vm1293, %v1329, %v1341
  %v1354 = vsel %vm1294, %v1330, %v1342
  %v1355 = vsel %vm1295, %v1331, %v1343
  %v1368 = vcombine.low %v1344, %v1345
  %v1369 = vcombine.low %v1346, %v1347
  %v1371 = vunpack.c.l.s4 1983009808
  %v1372 = vunpack.c.0.s8 %v1371
  %v1373 = vlaneseq
  %v1374 = vshrl.u32 %v1373, 7
  %v1375 = vsub.s32 %v1372, %v1374
  %v1376 = vrot.slane %v1368, %v1375
  %v1378 = vunpack.c.l.s4 1983009808
  %v1379 = vunpack.c.0.s8 %v1378
  %v1380 = vlaneseq
  %v1381 = vshrl.u32 %v1380, 7
  %v1382 = vsub.s32 %v1379, %v1381
  %v1383 = vrot.slane %v1369, %v1382
  %v1384 = vcombine.low %v1376, %v1383
  %v1385 = vcombine.low %v1348, %v1349
  %v1386 = vcombine.low %v1350, %v1351
  %v1388 = vunpack.c.l.s4 1983009808
  %v1389 = vunpack.c.0.s8 %v1388
  %v1390 = vlaneseq
  %v1391 = vshrl.u32 %v1390, 7
  %v1392 = vsub.s32 %v1389, %v1391
  %v1393 = vrot.slane %v1385, %v1392
  %v1395 = vunpack.c.l.s4 1983009808
  %v1396 = vunpack.c.0.s8 %v1395
  %v1397 = vlaneseq
  %v1398 = vshrl.u32 %v1397, 7
  %v1399 = vsub.s32 %v1396, %v1398
  %v1400 = vrot.slane %v1386, %v1399
  %v1401 = vcombine.low %v1393, %v1400
  %v1402 = vcombine.low %v1352, %v1353
  %v1403 = vcombine.low %v1354, %v1355
  %v1405 = vunpack.c.l.s4 1983009808
  %v1406 = vunpack.c.0.s8 %v1405
  %v1407 = vlaneseq
  %v1408 = vshrl.u32 %v1407, 7
  %v1409 = vsub.s32 %v1406, %v1408
  %v1410 = vrot.slane %v1402, %v1409
  %v1412 = vunpack.c.l.s4 1983009808
  %v1413 = vunpack.c.0.s8 %v1412
  %v1414 = vlaneseq
  %v1415 = vshrl.u32 %v1414, 7
  %v1416 = vsub.s32 %v1413, %v1415
  %v1417 = vrot.slane %v1403, %v1416
  %v1418 = vcombine.low %v1410, %v1417
  %1422 = vst [vmem:[%s7] sm:$0xff] %v1384
  %1423 = vst [vmem:[%s7 + $0x8] sm:$0xff] %v1401
  %1424 = vst [vmem:[%s7 + $0x10] sm:$0xff] %v1418
  // Predicated region
  $region30: #{model_forward.1} parent=0 // pred_check
    _
  $region31: #{model_forward.1} parent=0 // pred_check_branch
    %1426 = sbr.rel (0) target = $region33
  $region32: #{model_forward.1} parent=0 // pred_region
    _
  $region33: #{model_forward.1} parent=0 // pred_fallthru
    _
  // Predicated region
  $region34: #{model_forward.1} parent=0 // pred_check
    _
  $region35: #{model_forward.1} parent=0 // pred_check_branch
    %1428 = sbr.rel (0) target = $region37
  $region36: #{model_forward.1} parent=0 // pred_region
    _
  $region37: #{model_forward.1} parent=0 // pred_fallthru
    _

</llo_original>
